<compile_context>
chip_gen: v6e
topology: v6e:2x2x1
jax: 0.10.0
libtpu: 0.0.40
codegen_flags: <defaults>
</compile_context>

<pallas_src>
import functools
import math

import jax
import jax.numpy as jnp
from jax.experimental import pallas as pl
from jax.experimental.pallas import tpu as pltpu


def _layernorm(x, gamma, beta, eps=1e-5):
    mu = jnp.mean(x, axis=-1, keepdims=True)
    var = jnp.mean((x - mu) ** 2, axis=-1, keepdims=True)
    return (x - mu) * jax.lax.rsqrt(var + eps) * gamma + beta


def _transformer_block_kernel(k_ref, q_ref, v_ref,
                              wq_ref, wk_ref, wv_ref,
                              wo_ref, bo_ref,
                              g_ref, b_ref,
                              w1_ref, b1_ref,
                              w2_ref, b2_ref,
                              o_ref,
                              kp_sc, vp_sc,
                              *, heads, ffn_chunk):
    S = k_ref.shape[1]
    TQ = q_ref.shape[1]
    E = q_ref.shape[2]
    D = E // heads
    mxu_dtype = q_ref.dtype                     # feed MXU native-dtype operands
    qi = pl.program_id(1)

    # ---- K/V projections: per-batch only, so compute once per batch (query-tile axis is
    #      sequential) and cache in VMEM scratch in MXU dtype. ----
    @pl.when(qi == 0)
    def _():
        k = k_ref[0]                            # (S, E) native dtype
        v = v_ref[0]                            # (S, E)
        kp_sc[...] = jnp.dot(k, wk_ref[...],
                             preferred_element_type=jnp.float32).astype(mxu_dtype)
        vp_sc[...] = jnp.dot(v, wv_ref[...],
                             preferred_element_type=jnp.float32).astype(mxu_dtype)

    # Epilogue constants in f32, loaded once per tile (no re-broadcast in loops).
    gamma = g_ref[...].astype(jnp.float32)      # (1, E)
    beta = b_ref[...].astype(jnp.float32)       # (1, E)
    bo = bo_ref[...].astype(jnp.float32)        # (1, E)
    b2 = b2_ref[...].astype(jnp.float32)        # (1, E)

    # ---- Q projection for this query tile (block-diagonal, pre-transposed weight). ----
    q = q_ref[0]                                # (TQ, E) native dtype
    qp = jnp.dot(q, wq_ref[...],
                 preferred_element_type=jnp.float32).astype(mxu_dtype)
    kp = kp_sc[...]                             # (S, E) cached
    vp = vp_sc[...]                             # (S, E) cached

    # ---- per-head attention on static lane slices (no (H,S,D) relayouts) ----
    scale = 1.0 / math.sqrt(D)
    ctx_heads = []
    for h in range(heads):
        lo, hi = h * D, (h + 1) * D
        qh = qp[:, lo:hi]                       # (TQ, D)
        kh = kp[:, lo:hi]                       # (S,  D)
        vh = vp[:, lo:hi]                       # (S,  D)
        s = jax.lax.dot_general(                # q @ k^T without explicit transpose
            qh, kh, (((1,), (1,)), ((), ())),
            preferred_element_type=jnp.float32) * scale          # (TQ, S) f32
        s = s - jnp.max(s, axis=-1, keepdims=True)
        p = jnp.exp(s)
        denom = jnp.sum(p, axis=-1, keepdims=True)
        p = p * pl.reciprocal(denom, approx=True)                # EUP reciprocal
        ctx_heads.append(
            jnp.dot(p.astype(mxu_dtype), vh,
                    preferred_element_type=jnp.float32))         # (TQ, D)
    ctx = jnp.concatenate(ctx_heads, axis=-1)                    # (TQ, E) f32

    mha = jnp.dot(ctx.astype(mxu_dtype), wo_ref[...],
                  preferred_element_type=jnp.float32) + bo

    # residual with the value input at this query tile, then LayerNorm (f32)
    start = pl.multiple_of(qi * TQ, TQ)
    v_res = v_ref[0, pl.ds(start, TQ), :].astype(jnp.float32)
    ln1 = _layernorm(mha + v_res, gamma, beta)                   # (TQ, E) f32

    # ---- feed-forward: hidden (4E) dim processed in chunks to bound VMEM ----
    ln1_m = ln1.astype(mxu_dtype)
    hdim = w1_ref.shape[1]
    ff = jnp.zeros((TQ, E), jnp.float32)
    for c in range(hdim // ffn_chunk):
        c0, c1 = c * ffn_chunk, (c + 1) * ffn_chunk
        b1_c = b1_ref[:, c0:c1].astype(jnp.float32)
        h1 = jnp.dot(ln1_m, w1_ref[:, c0:c1],
                     preferred_element_type=jnp.float32) + b1_c
        h1 = jnp.maximum(h1, 0.0)
        ff = ff + jnp.dot(h1.astype(mxu_dtype), w2_ref[c0:c1, :],
                          preferred_element_type=jnp.float32)
    ff = ff + b2

    out = _layernorm(ff + ln1, gamma, beta)      # same LayerNorm params reused
    o_ref[0] = out.astype(o_ref.dtype)


def _full_spec(shape):
    nd = len(shape)
    return pl.BlockSpec(shape, lambda b, qi, _nd=nd: (0,) * _nd)


def _pick_q_tile(S):
    for t in (256, 128):
        if S % t == 0:
            return t
    return S


def _pick_ffn_chunk(hdim):
    if hdim <= 512:
        return hdim
    for c in (512, 256, 128):
        if hdim % c == 0:
            return c
    return hdim


def transformer_block(key_x, query_x, value_x, params, *, heads):
    B, S, E = query_x.shape
    dtype = query_x.dtype

    # Fold per-head Linear(head_dim, head_dim) into block-diagonal (E, E) matrices and
    # pre-transpose every weight so the kernel only does plain x @ W (no in-kernel .T).
    eye = jnp.eye(heads, dtype=jnp.float32)
    wq_bd = jnp.kron(eye, params['wq'].astype(jnp.float32)).T.astype(dtype)
    wk_bd = jnp.kron(eye, params['wk'].astype(jnp.float32)).T.astype(dtype)
    wv_bd = jnp.kron(eye, params['wv'].astype(jnp.float32)).T.astype(dtype)
    wo_t = params['wo'].T.astype(dtype)         # (E, E)
    w1_t = params['w1'].T.astype(dtype)         # (E, 4E)
    w2_t = params['w2'].T.astype(dtype)         # (4E, E)

    param_list = [wq_bd, wk_bd, wv_bd, wo_t, params['bo'], params['gamma'],
                  params['beta'], w1_t, params['b1'], w2_t, params['b2']]

    TQ = _pick_q_tile(S)
    hdim = w1_t.shape[1]
    ffn_chunk = _pick_ffn_chunk(hdim)

    # Explicit VMEM budget (default scoped limit is only 16/32 MiB on v5e/v6e).
    itemsize = jnp.dtype(dtype).itemsize
    weight_bytes = sum(int(p.size) * jnp.dtype(p.dtype).itemsize for p in param_list)
    io_bytes = (2 * S * E + 2 * TQ * E) * itemsize          # k, v full + q/out tiles
    scratch_bytes = 2 * S * E * itemsize                    # cached K/V projections
    interm_bytes = 4 * (2 * TQ * S + TQ * ffn_chunk + 8 * TQ * E + 3 * S * E)
    est = 2 * (weight_bytes + io_bytes) + interm_bytes + scratch_bytes
    try:
        vmem_cap = int(pltpu.get_tpu_info().vmem_capacity_bytes)
    except Exception:
        vmem_cap = 64 * 1024 * 1024
    vmem_limit = int(min(max(2 * est, 32 * 1024 * 1024), int(0.9 * vmem_cap)))

    seq_full = pl.BlockSpec((1, S, E), lambda b, qi: (b, 0, 0))
    q_spec = pl.BlockSpec((1, TQ, E), lambda b, qi: (b, qi, 0))

    kernel = functools.partial(_transformer_block_kernel, heads=heads,
                               ffn_chunk=ffn_chunk)
    return pl.pallas_call(
        kernel,
        out_shape=jax.ShapeDtypeStruct((B, S, E), dtype),
        grid_spec=pltpu.PrefetchScalarGridSpec(
            num_scalar_prefetch=0,
            grid=(B, S // TQ),
            in_specs=[seq_full, q_spec, seq_full]
                     + [_full_spec(p.shape) for p in param_list],
            out_specs=pl.BlockSpec((1, TQ, E), lambda b, qi: (b, qi, 0)),
            scratch_shapes=[pltpu.VMEM((S, E), dtype),     # cached K projection
                            pltpu.VMEM((S, E), dtype)],    # cached V projection
        ),
        compiler_params=pltpu.CompilerParams(
            # query-tile axis is "arbitrary" so the per-batch K/V scratch cache is valid;
            # the batch axis stays "parallel" for megacore sharding.
            dimension_semantics=("parallel", "arbitrary"),
            vmem_limit_bytes=vmem_limit),
    )(key_x, query_x, value_x, *param_list)


# ---------------- pure-JAX reference (for correctness check) ----------------
def reference(key_x, query_x, value_x, params, *, heads):
    B, S, E = query_x.shape
    D = E // heads

    def proj(x, w):
        xh = x.reshape(B, S, heads, D)
        return jnp.einsum('bshd,ed->bshe', xh, w)

    qp = proj(query_x, params['wq'])
    kp = proj(key_x, params['wk'])
    vp = proj(value_x, params['wv'])

    scores = jnp.einsum('bqhd,bkhd->bhqk', qp, kp) / jnp.sqrt(jnp.float32(D))
    attn = jax.nn.softmax(scores, axis=-1)
    ctx = jnp.einsum('bhqk,bkhd->bqhd', attn, vp).reshape(B, S, E)
    mha = ctx @ params['wo'].T + params['bo']

    x1 = mha + value_x
    ln1 = _layernorm(x1, params['gamma'], params['beta'])
    h = jnp.maximum(ln1 @ params['w1'].T + params['b1'], 0.0)
    ff = h @ params['w2'].T + params['b2']
    x2 = ff + ln1
    return _layernorm(x2, params['gamma'], params['beta'])


def init_params(key, embed_dim, heads, expansion_factor):
    D = embed_dim // heads
    ks = jax.random.split(key, 10)
    n = lambda k, shape, s: (s * jax.random.normal(k, shape)).astype(jnp.float32)
    return {
        'wq': n(ks[0], (D, D), 0.1),
        'wk': n(ks[1], (D, D), 0.1),
        'wv': n(ks[2], (D, D), 0.1),
        'wo': n(ks[3], (embed_dim, embed_dim), 0.1),
        'bo': n(ks[4], (1, embed_dim), 0.01),
        'gamma': jnp.ones((1, embed_dim), jnp.float32),
        'beta': jnp.zeros((1, embed_dim), jnp.float32),
        'w1': n(ks[5], (expansion_factor * embed_dim, embed_dim), 0.1),
        'b1': n(ks[6], (1, expansion_factor * embed_dim), 0.01),
        'w2': n(ks[7], (embed_dim, expansion_factor * embed_dim), 0.1),
        'b2': n(ks[8], (1, embed_dim), 0.01),
    }


if __name__ == "__main__":
    B, S, E, H, EXP = 2, 8, 32, 4, 4
    root = jax.random.PRNGKey(0)
    kk, kq, kv, kp = jax.random.split(root, 4)
    key_x = jax.random.normal(kk, (B, S, E), jnp.float32)
    query_x = jax.random.normal(kq, (B, S, E), jnp.float32)
    value_x = jax.random.normal(kv, (B, S, E), jnp.float32)
    params = init_params(kp, E, H, EXP)

    out = transformer_block(key_x, query_x, value_x, params, heads=H)
    out = jax.block_until_ready(out)

    ref = reference(key_x, query_x, value_x, params, heads=H)
    assert out.shape == (B, S, E)
    # tolerance loosened slightly vs exact f32 because the softmax normalization uses the
    # approximate EUP reciprocal (pl.reciprocal(..., approx=True))
    assert jnp.allclose(out, ref, atol=1e-2, rtol=1e-2), "mismatch vs JAX reference"
    print("KERNEL_OK")
</pallas_src>

<mosaic_0001>
module attributes {stable_mosaic.version = 11 : i64} {
  func.func @_transformer_block_kernel(%arg0: i32, %arg1: i32, %arg2: memref<1x8x32xf32, #tpu.memory_space<vmem>>, %arg3: memref<1x8x32xf32, #tpu.memory_space<vmem>>, %arg4: memref<1x8x32xf32, #tpu.memory_space<vmem>>, %arg5: memref<32x32xf32, #tpu.memory_space<vmem>>, %arg6: memref<32x32xf32, #tpu.memory_space<vmem>>, %arg7: memref<32x32xf32, #tpu.memory_space<vmem>>, %arg8: memref<32x32xf32, #tpu.memory_space<vmem>>, %arg9: memref<1x32xf32, #tpu.memory_space<vmem>>, %arg10: memref<1x32xf32, #tpu.memory_space<vmem>>, %arg11: memref<1x32xf32, #tpu.memory_space<vmem>>, %arg12: memref<32x128xf32, #tpu.memory_space<vmem>>, %arg13: memref<1x128xf32, #tpu.memory_space<vmem>>, %arg14: memref<128x32xf32, #tpu.memory_space<vmem>>, %arg15: memref<1x32xf32, #tpu.memory_space<vmem>>, %arg16: memref<1x8x32xf32, #tpu.memory_space<vmem>>, %arg17: memref<8x32xf32, #tpu.memory_space<vmem>>, %arg18: memref<8x32xf32, #tpu.memory_space<vmem>>) attributes {dimension_semantics = [#tpu.dimension_semantics<parallel>, #tpu.dimension_semantics<arbitrary>], iteration_bounds = array<i64: 2, 1>, scalar_prefetch = 0 : i64, scratch_operands = 2 : i64, tpu.core_type = #tpu.core_type<tc>, window_params = [{transform_indices = @transform_0, window_bounds = array<i64: 1, 8, 32>}, {transform_indices = @transform_1, window_bounds = array<i64: 1, 8, 32>}, {transform_indices = @transform_2, window_bounds = array<i64: 1, 8, 32>}, {pipeline_mode = #tpu.pipeline_mode<synchronous>, transform_indices = @transform_3, window_bounds = array<i64: 32, 32>}, {pipeline_mode = #tpu.pipeline_mode<synchronous>, transform_indices = @transform_4, window_bounds = array<i64: 32, 32>}, {pipeline_mode = #tpu.pipeline_mode<synchronous>, transform_indices = @transform_5, window_bounds = array<i64: 32, 32>}, {pipeline_mode = #tpu.pipeline_mode<synchronous>, transform_indices = @transform_6, window_bounds = array<i64: 32, 32>}, {pipeline_mode = #tpu.pipeline_mode<synchronous>, transform_indices = @transform_7, window_bounds = array<i64: 1, 32>}, {pipeline_mode = #tpu.pipeline_mode<synchronous>, transform_indices = @transform_8, window_bounds = array<i64: 1, 32>}, {pipeline_mode = #tpu.pipeline_mode<synchronous>, transform_indices = @transform_9, window_bounds = array<i64: 1, 32>}, {pipeline_mode = #tpu.pipeline_mode<synchronous>, transform_indices = @transform_10, window_bounds = array<i64: 32, 128>}, {pipeline_mode = #tpu.pipeline_mode<synchronous>, transform_indices = @transform_11, window_bounds = array<i64: 1, 128>}, {pipeline_mode = #tpu.pipeline_mode<synchronous>, transform_indices = @transform_12, window_bounds = array<i64: 128, 32>}, {pipeline_mode = #tpu.pipeline_mode<synchronous>, transform_indices = @transform_13, window_bounds = array<i64: 1, 32>}, {transform_indices = @transform_14, window_bounds = array<i64: 1, 8, 32>}]} {
    %c0_i32 = arith.constant 0 : i32
    %0 = arith.cmpi eq, %arg1, %c0_i32 : i32
    %1 = arith.extui %0 : i1 to i32
    %c0_i32_0 = arith.constant 0 : i32
    %2 = arith.cmpi ne, %1, %c0_i32_0 : i32
    scf.if %2 {
      %c0_65 = arith.constant 0 : index
      %c0_66 = arith.constant 0 : index
      %c0_67 = arith.constant 0 : index
      %153 = vector.load %arg2[%c0_65, %c0_66, %c0_67] : memref<1x8x32xf32, #tpu.memory_space<vmem>>, vector<1x8x32xf32>
      %154 = vector.shape_cast %153 : vector<1x8x32xf32> to vector<8x32xf32>
      %c0_68 = arith.constant 0 : index
      %c0_69 = arith.constant 0 : index
      %c0_70 = arith.constant 0 : index
      %155 = vector.load %arg4[%c0_68, %c0_69, %c0_70] : memref<1x8x32xf32, #tpu.memory_space<vmem>>, vector<1x8x32xf32>
      %156 = vector.shape_cast %155 : vector<1x8x32xf32> to vector<8x32xf32>
      %c0_71 = arith.constant 0 : index
      %c0_72 = arith.constant 0 : index
      %157 = vector.load %arg6[%c0_71, %c0_72] : memref<32x32xf32, #tpu.memory_space<vmem>>, vector<32x32xf32>
      %cst_73 = arith.constant dense<0.000000e+00> : vector<8x32xf32>
      %158 = tpu.matmul %154, %157, %cst_73 {dimension_numbers = #tpu.dot_dimension_numbers<[1], [0], [0], [1], [0, 0, 1, 1], [], []>} : vector<8x32xf32>, vector<32x32xf32>, vector<8x32xf32> -> vector<8x32xf32>
      %c0_74 = arith.constant 0 : index
      %c0_75 = arith.constant 0 : index
      %159 = vector.load %arg17[%c0_74, %c0_75] : memref<8x32xf32, #tpu.memory_space<vmem>>, vector<8x32xf32>
      tpu.vector_store %arg17[%c0_74, %c0_75], %158 {strides = array<i32>} : memref<8x32xf32, #tpu.memory_space<vmem>>, vector<8x32xf32>,
      %c0_76 = arith.constant 0 : index
      %c0_77 = arith.constant 0 : index
      %160 = vector.load %arg7[%c0_76, %c0_77] : memref<32x32xf32, #tpu.memory_space<vmem>>, vector<32x32xf32>
      %cst_78 = arith.constant dense<0.000000e+00> : vector<8x32xf32>
      %161 = tpu.matmul %156, %160, %cst_78 {dimension_numbers = #tpu.dot_dimension_numbers<[1], [0], [0], [1], [0, 0, 1, 1], [], []>} : vector<8x32xf32>, vector<32x32xf32>, vector<8x32xf32> -> vector<8x32xf32>
      %c0_79 = arith.constant 0 : index
      %c0_80 = arith.constant 0 : index
      %162 = vector.load %arg18[%c0_79, %c0_80] : memref<8x32xf32, #tpu.memory_space<vmem>>, vector<8x32xf32>
      tpu.vector_store %arg18[%c0_79, %c0_80], %161 {strides = array<i32>} : memref<8x32xf32, #tpu.memory_space<vmem>>, vector<8x32xf32>,
    } else {
    }
    %c0 = arith.constant 0 : index
    %c0_1 = arith.constant 0 : index
    %3 = vector.load %arg10[%c0, %c0_1] : memref<1x32xf32, #tpu.memory_space<vmem>>, vector<1x32xf32>
    %c0_2 = arith.constant 0 : index
    %c0_3 = arith.constant 0 : index
    %4 = vector.load %arg11[%c0_2, %c0_3] : memref<1x32xf32, #tpu.memory_space<vmem>>, vector<1x32xf32>
    %c0_4 = arith.constant 0 : index
    %c0_5 = arith.constant 0 : index
    %5 = vector.load %arg9[%c0_4, %c0_5] : memref<1x32xf32, #tpu.memory_space<vmem>>, vector<1x32xf32>
    %c0_6 = arith.constant 0 : index
    %c0_7 = arith.constant 0 : index
    %6 = vector.load %arg15[%c0_6, %c0_7] : memref<1x32xf32, #tpu.memory_space<vmem>>, vector<1x32xf32>
    %c0_8 = arith.constant 0 : index
    %c0_9 = arith.constant 0 : index
    %c0_10 = arith.constant 0 : index
    %7 = vector.load %arg3[%c0_8, %c0_9, %c0_10] : memref<1x8x32xf32, #tpu.memory_space<vmem>>, vector<1x8x32xf32>
    %8 = vector.shape_cast %7 : vector<1x8x32xf32> to vector<8x32xf32>
    %c0_11 = arith.constant 0 : index
    %c0_12 = arith.constant 0 : index
    %9 = vector.load %arg5[%c0_11, %c0_12] : memref<32x32xf32, #tpu.memory_space<vmem>>, vector<32x32xf32>
    %cst = arith.constant dense<0.000000e+00> : vector<8x32xf32>
    %10 = tpu.matmul %8, %9, %cst {dimension_numbers = #tpu.dot_dimension_numbers<[1], [0], [0], [1], [0, 0, 1, 1], [], []>} : vector<8x32xf32>, vector<32x32xf32>, vector<8x32xf32> -> vector<8x32xf32>
    %c0_13 = arith.constant 0 : index
    %c0_14 = arith.constant 0 : index
    %11 = vector.load %arg17[%c0_13, %c0_14] : memref<8x32xf32, #tpu.memory_space<vmem>>, vector<8x32xf32>
    %c0_15 = arith.constant 0 : index
    %c0_16 = arith.constant 0 : index
    %12 = vector.load %arg18[%c0_15, %c0_16] : memref<8x32xf32, #tpu.memory_space<vmem>>, vector<8x32xf32>
    %13 = vector.extract_strided_slice %10 {offsets = [0, 0], sizes = [8, 8], strides = [1, 1]} : vector<8x32xf32> to vector<8x8xf32>
    %14 = vector.extract_strided_slice %11 {offsets = [0, 0], sizes = [8, 8], strides = [1, 1]} : vector<8x32xf32> to vector<8x8xf32>
    %15 = vector.extract_strided_slice %12 {offsets = [0, 0], sizes = [8, 8], strides = [1, 1]} : vector<8x32xf32> to vector<8x8xf32>
    %cst_17 = arith.constant dense<0.000000e+00> : vector<8x8xf32>
    %16 = tpu.matmul %13, %14, %cst_17 {dimension_numbers = #tpu.dot_dimension_numbers<[1], [1], [0], [0], [0, 0, 1, 0], [], []>} : vector<8x8xf32>, vector<8x8xf32>, vector<8x8xf32> -> vector<8x8xf32>
    %cst_18 = arith.constant 0.353553385 : f32
    %17 = vector.broadcast %cst_18 : f32 to vector<8x8xf32>
    %18 = arith.mulf %16, %17 : vector<8x8xf32>
    %cst_19 = arith.constant dense<0xFF800000> : vector<8xf32>
    %19 = vector.multi_reduction <maximumf>, %18, %cst_19 [1] : vector<8x8xf32> to vector<8xf32>
    %20 = vector.shape_cast %19 : vector<8xf32> to vector<8x1xf32>
    %21 = vector.broadcast %20 : vector<8x1xf32> to vector<8x8xf32>
    %22 = arith.subf %18, %21 : vector<8x8xf32>
    %23 = math.exp %22 : vector<8x8xf32>
    %cst_20 = arith.constant dense<0.000000e+00> : vector<8xf32>
    %24 = vector.multi_reduction <add>, %23, %cst_20 [1] : vector<8x8xf32> to vector<8xf32>
    %25 = vector.shape_cast %24 : vector<8xf32> to vector<8x1xf32>
    %26 = tpu.reciprocal %25 {approx = true} : vector<8x1xf32> -> vector<8x1xf32>
    %27 = vector.broadcast %26 : vector<8x1xf32> to vector<8x8xf32>
    %28 = arith.mulf %23, %27 : vector<8x8xf32>
    %cst_21 = arith.constant dense<0.000000e+00> : vector<8x8xf32>
    %29 = tpu.matmul %28, %15, %cst_21 {dimension_numbers = #tpu.dot_dimension_numbers<[1], [0], [0], [1], [0, 0, 1, 1], [], []>} : vector<8x8xf32>, vector<8x8xf32>, vector<8x8xf32> -> vector<8x8xf32>
    %30 = vector.extract_strided_slice %10 {offsets = [0, 8], sizes = [8, 8], strides = [1, 1]} : vector<8x32xf32> to vector<8x8xf32>
    %31 = vector.extract_strided_slice %11 {offsets = [0, 8], sizes = [8, 8], strides = [1, 1]} : vector<8x32xf32> to vector<8x8xf32>
    %32 = vector.extract_strided_slice %12 {offsets = [0, 8], sizes = [8, 8], strides = [1, 1]} : vector<8x32xf32> to vector<8x8xf32>
    %cst_22 = arith.constant dense<0.000000e+00> : vector<8x8xf32>
    %33 = tpu.matmul %30, %31, %cst_22 {dimension_numbers = #tpu.dot_dimension_numbers<[1], [1], [0], [0], [0, 0, 1, 0], [], []>} : vector<8x8xf32>, vector<8x8xf32>, vector<8x8xf32> -> vector<8x8xf32>
    %cst_23 = arith.constant 0.353553385 : f32
    %34 = vector.broadcast %cst_23 : f32 to vector<8x8xf32>
    %35 = arith.mulf %33, %34 : vector<8x8xf32>
    %cst_24 = arith.constant dense<0xFF800000> : vector<8xf32>
    %36 = vector.multi_reduction <maximumf>, %35, %cst_24 [1] : vector<8x8xf32> to vector<8xf32>
    %37 = vector.shape_cast %36 : vector<8xf32> to vector<8x1xf32>
    %38 = vector.broadcast %37 : vector<8x1xf32> to vector<8x8xf32>
    %39 = arith.subf %35, %38 : vector<8x8xf32>
    %40 = math.exp %39 : vector<8x8xf32>
    %cst_25 = arith.constant dense<0.000000e+00> : vector<8xf32>
    %41 = vector.multi_reduction <add>, %40, %cst_25 [1] : vector<8x8xf32> to vector<8xf32>
    %42 = vector.shape_cast %41 : vector<8xf32> to vector<8x1xf32>
    %43 = tpu.reciprocal %42 {approx = true} : vector<8x1xf32> -> vector<8x1xf32>
    %44 = vector.broadcast %43 : vector<8x1xf32> to vector<8x8xf32>
    %45 = arith.mulf %40, %44 : vector<8x8xf32>
    %cst_26 = arith.constant dense<0.000000e+00> : vector<8x8xf32>
    %46 = tpu.matmul %45, %32, %cst_26 {dimension_numbers = #tpu.dot_dimension_numbers<[1], [0], [0], [1], [0, 0, 1, 1], [], []>} : vector<8x8xf32>, vector<8x8xf32>, vector<8x8xf32> -> vector<8x8xf32>
    %47 = vector.extract_strided_slice %10 {offsets = [0, 16], sizes = [8, 8], strides = [1, 1]} : vector<8x32xf32> to vector<8x8xf32>
    %48 = vector.extract_strided_slice %11 {offsets = [0, 16], sizes = [8, 8], strides = [1, 1]} : vector<8x32xf32> to vector<8x8xf32>
    %49 = vector.extract_strided_slice %12 {offsets = [0, 16], sizes = [8, 8], strides = [1, 1]} : vector<8x32xf32> to vector<8x8xf32>
    %cst_27 = arith.constant dense<0.000000e+00> : vector<8x8xf32>
    %50 = tpu.matmul %47, %48, %cst_27 {dimension_numbers = #tpu.dot_dimension_numbers<[1], [1], [0], [0], [0, 0, 1, 0], [], []>} : vector<8x8xf32>, vector<8x8xf32>, vector<8x8xf32> -> vector<8x8xf32>
    %cst_28 = arith.constant 0.353553385 : f32
    %51 = vector.broadcast %cst_28 : f32 to vector<8x8xf32>
    %52 = arith.mulf %50, %51 : vector<8x8xf32>
    %cst_29 = arith.constant dense<0xFF800000> : vector<8xf32>
    %53 = vector.multi_reduction <maximumf>, %52, %cst_29 [1] : vector<8x8xf32> to vector<8xf32>
    %54 = vector.shape_cast %53 : vector<8xf32> to vector<8x1xf32>
    %55 = vector.broadcast %54 : vector<8x1xf32> to vector<8x8xf32>
    %56 = arith.subf %52, %55 : vector<8x8xf32>
    %57 = math.exp %56 : vector<8x8xf32>
    %cst_30 = arith.constant dense<0.000000e+00> : vector<8xf32>
    %58 = vector.multi_reduction <add>, %57, %cst_30 [1] : vector<8x8xf32> to vector<8xf32>
    %59 = vector.shape_cast %58 : vector<8xf32> to vector<8x1xf32>
    %60 = tpu.reciprocal %59 {approx = true} : vector<8x1xf32> -> vector<8x1xf32>
    %61 = vector.broadcast %60 : vector<8x1xf32> to vector<8x8xf32>
    %62 = arith.mulf %57, %61 : vector<8x8xf32>
    %cst_31 = arith.constant dense<0.000000e+00> : vector<8x8xf32>
    %63 = tpu.matmul %62, %49, %cst_31 {dimension_numbers = #tpu.dot_dimension_numbers<[1], [0], [0], [1], [0, 0, 1, 1], [], []>} : vector<8x8xf32>, vector<8x8xf32>, vector<8x8xf32> -> vector<8x8xf32>
    %64 = vector.extract_strided_slice %10 {offsets = [0, 24], sizes = [8, 8], strides = [1, 1]} : vector<8x32xf32> to vector<8x8xf32>
    %65 = vector.extract_strided_slice %11 {offsets = [0, 24], sizes = [8, 8], strides = [1, 1]} : vector<8x32xf32> to vector<8x8xf32>
    %66 = vector.extract_strided_slice %12 {offsets = [0, 24], sizes = [8, 8], strides = [1, 1]} : vector<8x32xf32> to vector<8x8xf32>
    %cst_32 = arith.constant dense<0.000000e+00> : vector<8x8xf32>
    %67 = tpu.matmul %64, %65, %cst_32 {dimension_numbers = #tpu.dot_dimension_numbers<[1], [1], [0], [0], [0, 0, 1, 0], [], []>} : vector<8x8xf32>, vector<8x8xf32>, vector<8x8xf32> -> vector<8x8xf32>
    %cst_33 = arith.constant 0.353553385 : f32
    %68 = vector.broadcast %cst_33 : f32 to vector<8x8xf32>
    %69 = arith.mulf %67, %68 : vector<8x8xf32>
    %cst_34 = arith.constant dense<0xFF800000> : vector<8xf32>
    %70 = vector.multi_reduction <maximumf>, %69, %cst_34 [1] : vector<8x8xf32> to vector<8xf32>
    %71 = vector.shape_cast %70 : vector<8xf32> to vector<8x1xf32>
    %72 = vector.broadcast %71 : vector<8x1xf32> to vector<8x8xf32>
    %73 = arith.subf %69, %72 : vector<8x8xf32>
    %74 = math.exp %73 : vector<8x8xf32>
    %cst_35 = arith.constant dense<0.000000e+00> : vector<8xf32>
    %75 = vector.multi_reduction <add>, %74, %cst_35 [1] : vector<8x8xf32> to vector<8xf32>
    %76 = vector.shape_cast %75 : vector<8xf32> to vector<8x1xf32>
    %77 = tpu.reciprocal %76 {approx = true} : vector<8x1xf32> -> vector<8x1xf32>
    %78 = vector.broadcast %77 : vector<8x1xf32> to vector<8x8xf32>
    %79 = arith.mulf %74, %78 : vector<8x8xf32>
    %cst_36 = arith.constant dense<0.000000e+00> : vector<8x8xf32>
    %80 = tpu.matmul %79, %66, %cst_36 {dimension_numbers = #tpu.dot_dimension_numbers<[1], [0], [0], [1], [0, 0, 1, 1], [], []>} : vector<8x8xf32>, vector<8x8xf32>, vector<8x8xf32> -> vector<8x8xf32>
    %81 = tpu.concatenate %29, %46, %63, %80 in 1 : vector<8x8xf32>, vector<8x8xf32>, vector<8x8xf32>, vector<8x8xf32> -> vector<8x32xf32>
    %c0_37 = arith.constant 0 : index
    %c0_38 = arith.constant 0 : index
    %82 = vector.load %arg8[%c0_37, %c0_38] : memref<32x32xf32, #tpu.memory_space<vmem>>, vector<32x32xf32>
    %cst_39 = arith.constant dense<0.000000e+00> : vector<8x32xf32>
    %83 = tpu.matmul %81, %82, %cst_39 {dimension_numbers = #tpu.dot_dimension_numbers<[1], [0], [0], [1], [0, 0, 1, 1], [], []>} : vector<8x32xf32>, vector<32x32xf32>, vector<8x32xf32> -> vector<8x32xf32>
    %84 = vector.broadcast %5 : vector<1x32xf32> to vector<8x32xf32>
    %85 = arith.addf %83, %84 : vector<8x32xf32>
    %c8_i32 = arith.constant 8 : i32
    %86 = arith.muli %arg1, %c8_i32 : i32
    %87 = tpu.assume_multiple %86, 8 : i32
    %c0_40 = arith.constant 0 : index
    %88 = arith.index_cast %87 : i32 to index
    %c0_41 = arith.constant 0 : index
    %89 = vector.load %arg4[%c0_40, %88, %c0_41] : memref<1x8x32xf32, #tpu.memory_space<vmem>>, vector<1x8x32xf32>
    %90 = vector.shape_cast %89 : vector<1x8x32xf32> to vector<8x32xf32>
    %91 = arith.addf %85, %90 : vector<8x32xf32>
    %cst_42 = arith.constant dense<0.000000e+00> : vector<8xf32>
    %92 = vector.multi_reduction <add>, %91, %cst_42 [1] : vector<8x32xf32> to vector<8xf32>
    %93 = vector.shape_cast %92 : vector<8xf32> to vector<8x1xf32>
    %cst_43 = arith.constant 3.200000e+01 : f32
    %94 = vector.broadcast %cst_43 : f32 to vector<8x1xf32>
    %95 = arith.divf %93, %94 : vector<8x1xf32>
    %96 = vector.broadcast %95 : vector<8x1xf32> to vector<8x32xf32>
    %97 = arith.subf %91, %96 : vector<8x32xf32>
    %98 = arith.mulf %97, %97 : vector<8x32xf32>
    %cst_44 = arith.constant dense<0.000000e+00> : vector<8xf32>
    %99 = vector.multi_reduction <add>, %98, %cst_44 [1] : vector<8x32xf32> to vector<8xf32>
    %100 = vector.shape_cast %99 : vector<8xf32> to vector<8x1xf32>
    %cst_45 = arith.constant 3.200000e+01 : f32
    %101 = vector.broadcast %cst_45 : f32 to vector<8x1xf32>
    %102 = arith.divf %100, %101 : vector<8x1xf32>
    %103 = vector.broadcast %95 : vector<8x1xf32> to vector<8x32xf32>
    %104 = arith.subf %91, %103 : vector<8x32xf32>
    %cst_46 = arith.constant 9.99999974E-6 : f32
    %105 = vector.broadcast %cst_46 : f32 to vector<8x1xf32>
    %106 = arith.addf %102, %105 : vector<8x1xf32>
    %107 = math.rsqrt %106 : vector<8x1xf32>
    %108 = vector.broadcast %107 : vector<8x1xf32> to vector<8x32xf32>
    %109 = arith.mulf %104, %108 : vector<8x32xf32>
    %110 = vector.broadcast %3 : vector<1x32xf32> to vector<8x32xf32>
    %111 = arith.mulf %109, %110 : vector<8x32xf32>
    %112 = vector.broadcast %4 : vector<1x32xf32> to vector<8x32xf32>
    %113 = arith.addf %111, %112 : vector<8x32xf32>
    %cst_47 = arith.constant 0.000000e+00 : f32
    %114 = vector.broadcast %cst_47 : f32 to vector<8x32xf32>
    %c0_48 = arith.constant 0 : index
    %c0_49 = arith.constant 0 : index
    %115 = vector.load %arg13[%c0_48, %c0_49] : memref<1x128xf32, #tpu.memory_space<vmem>>, vector<1x128xf32>
    %c0_50 = arith.constant 0 : index
    %c0_51 = arith.constant 0 : index
    %116 = vector.load %arg12[%c0_50, %c0_51] : memref<32x128xf32, #tpu.memory_space<vmem>>, vector<32x128xf32>
    %cst_52 = arith.constant dense<0.000000e+00> : vector<8x128xf32>
    %117 = tpu.matmul %113, %116, %cst_52 {dimension_numbers = #tpu.dot_dimension_numbers<[1], [0], [0], [1], [0, 0, 1, 1], [], []>} : vector<8x32xf32>, vector<32x128xf32>, vector<8x128xf32> -> vector<8x128xf32>
    %118 = vector.broadcast %115 : vector<1x128xf32> to vector<8x128xf32>
    %119 = arith.addf %117, %118 : vector<8x128xf32>
    %cst_53 = arith.constant 0.000000e+00 : f32
    %120 = vector.broadcast %cst_53 : f32 to vector<8x128xf32>
    %121 = arith.maximumf %119, %120 : vector<8x128xf32>
    %c0_54 = arith.constant 0 : index
    %c0_55 = arith.constant 0 : index
    %122 = vector.load %arg14[%c0_54, %c0_55] : memref<128x32xf32, #tpu.memory_space<vmem>>, vector<128x32xf32>
    %cst_56 = arith.constant dense<0.000000e+00> : vector<8x32xf32>
    %123 = tpu.matmul %121, %122, %cst_56 {dimension_numbers = #tpu.dot_dimension_numbers<[1], [0], [0], [1], [0, 0, 1, 1], [], []>} : vector<8x128xf32>, vector<128x32xf32>, vector<8x32xf32> -> vector<8x32xf32>
    %124 = arith.addf %114, %123 : vector<8x32xf32>
    %125 = vector.broadcast %6 : vector<1x32xf32> to vector<8x32xf32>
    %126 = arith.addf %124, %125 : vector<8x32xf32>
    %127 = arith.addf %126, %113 : vector<8x32xf32>
    %cst_57 = arith.constant dense<0.000000e+00> : vector<8xf32>
    %128 = vector.multi_reduction <add>, %127, %cst_57 [1] : vector<8x32xf32> to vector<8xf32>
    %129 = vector.shape_cast %128 : vector<8xf32> to vector<8x1xf32>
    %cst_58 = arith.constant 3.200000e+01 : f32
    %130 = vector.broadcast %cst_58 : f32 to vector<8x1xf32>
    %131 = arith.divf %129, %130 : vector<8x1xf32>
    %132 = vector.broadcast %131 : vector<8x1xf32> to vector<8x32xf32>
    %133 = arith.subf %127, %132 : vector<8x32xf32>
    %134 = arith.mulf %133, %133 : vector<8x32xf32>
    %cst_59 = arith.constant dense<0.000000e+00> : vector<8xf32>
    %135 = vector.multi_reduction <add>, %134, %cst_59 [1] : vector<8x32xf32> to vector<8xf32>
    %136 = vector.shape_cast %135 : vector<8xf32> to vector<8x1xf32>
    %cst_60 = arith.constant 3.200000e+01 : f32
    %137 = vector.broadcast %cst_60 : f32 to vector<8x1xf32>
    %138 = arith.divf %136, %137 : vector<8x1xf32>
    %139 = vector.broadcast %131 : vector<8x1xf32> to vector<8x32xf32>
    %140 = arith.subf %127, %139 : vector<8x32xf32>
    %cst_61 = arith.constant 9.99999974E-6 : f32
    %141 = vector.broadcast %cst_61 : f32 to vector<8x1xf32>
    %142 = arith.addf %138, %141 : vector<8x1xf32>
    %143 = math.rsqrt %142 : vector<8x1xf32>
    %144 = vector.broadcast %143 : vector<8x1xf32> to vector<8x32xf32>
    %145 = arith.mulf %140, %144 : vector<8x32xf32>
    %146 = vector.broadcast %3 : vector<1x32xf32> to vector<8x32xf32>
    %147 = arith.mulf %145, %146 : vector<8x32xf32>
    %148 = vector.broadcast %4 : vector<1x32xf32> to vector<8x32xf32>
    %149 = arith.addf %147, %148 : vector<8x32xf32>
    %c0_62 = arith.constant 0 : index
    %c0_63 = arith.constant 0 : index
    %c0_64 = arith.constant 0 : index
    %150 = vector.load %arg16[%c0_62, %c0_63, %c0_64] : memref<1x8x32xf32, #tpu.memory_space<vmem>>, vector<1x8x32xf32>
    %151 = vector.shape_cast %150 : vector<1x8x32xf32> to vector<8x32xf32>
    %152 = vector.shape_cast %149 : vector<8x32xf32> to vector<1x8x32xf32>
    tpu.vector_store %arg16[%c0_62, %c0_63, %c0_64], %152 {strides = array<i32>} : memref<1x8x32xf32, #tpu.memory_space<vmem>>, vector<1x8x32xf32>,
    return
  }
  func.func @transform_0(%arg0: i32, %arg1: i32) -> (i32, i32, i32) {
    %c0_i32 = arith.constant 0 : i32
    %c0_i32_0 = arith.constant 0 : i32
    %c0_i32_1 = arith.constant 0 : i32
    return %arg0, %c0_i32, %c0_i32_0 : i32, i32, i32
  }
  func.func @transform_1(%arg0: i32, %arg1: i32) -> (i32, i32, i32) {
    %c0_i32 = arith.constant 0 : i32
    %c0_i32_0 = arith.constant 0 : i32
    return %arg0, %arg1, %c0_i32 : i32, i32, i32
  }
  func.func @transform_2(%arg0: i32, %arg1: i32) -> (i32, i32, i32) {
    %c0_i32 = arith.constant 0 : i32
    %c0_i32_0 = arith.constant 0 : i32
    %c0_i32_1 = arith.constant 0 : i32
    return %arg0, %c0_i32, %c0_i32_0 : i32, i32, i32
  }
  func.func @transform_3(%arg0: i32, %arg1: i32) -> (i32, i32) {
    %c0_i32 = arith.constant 0 : i32
    %c0_i32_0 = arith.constant 0 : i32
    %c0_i32_1 = arith.constant 0 : i32
    return %c0_i32, %c0_i32_0 : i32, i32
  }
  func.func @transform_4(%arg0: i32, %arg1: i32) -> (i32, i32) {
    %c0_i32 = arith.constant 0 : i32
    %c0_i32_0 = arith.constant 0 : i32
    %c0_i32_1 = arith.constant 0 : i32
    return %c0_i32, %c0_i32_0 : i32, i32
  }
  func.func @transform_5(%arg0: i32, %arg1: i32) -> (i32, i32) {
    %c0_i32 = arith.constant 0 : i32
    %c0_i32_0 = arith.constant 0 : i32
    %c0_i32_1 = arith.constant 0 : i32
    return %c0_i32, %c0_i32_0 : i32, i32
  }
  func.func @transform_6(%arg0: i32, %arg1: i32) -> (i32, i32) {
    %c0_i32 = arith.constant 0 : i32
    %c0_i32_0 = arith.constant 0 : i32
    %c0_i32_1 = arith.constant 0 : i32
    return %c0_i32, %c0_i32_0 : i32, i32
  }
  func.func @transform_7(%arg0: i32, %arg1: i32) -> (i32, i32) {
    %c0_i32 = arith.constant 0 : i32
    %c0_i32_0 = arith.constant 0 : i32
    %c0_i32_1 = arith.constant 0 : i32
    return %c0_i32, %c0_i32_0 : i32, i32
  }
  func.func @transform_8(%arg0: i32, %arg1: i32) -> (i32, i32) {
    %c0_i32 = arith.constant 0 : i32
    %c0_i32_0 = arith.constant 0 : i32
    %c0_i32_1 = arith.constant 0 : i32
    return %c0_i32, %c0_i32_0 : i32, i32
  }
  func.func @transform_9(%arg0: i32, %arg1: i32) -> (i32, i32) {
    %c0_i32 = arith.constant 0 : i32
    %c0_i32_0 = arith.constant 0 : i32
    %c0_i32_1 = arith.constant 0 : i32
    return %c0_i32, %c0_i32_0 : i32, i32
  }
  func.func @transform_10(%arg0: i32, %arg1: i32) -> (i32, i32) {
    %c0_i32 = arith.constant 0 : i32
    %c0_i32_0 = arith.constant 0 : i32
    %c0_i32_1 = arith.constant 0 : i32
    return %c0_i32, %c0_i32_0 : i32, i32
  }
  func.func @transform_11(%arg0: i32, %arg1: i32) -> (i32, i32) {
    %c0_i32 = arith.constant 0 : i32
    %c0_i32_0 = arith.constant 0 : i32
    %c0_i32_1 = arith.constant 0 : i32
    return %c0_i32, %c0_i32_0 : i32, i32
  }
  func.func @transform_12(%arg0: i32, %arg1: i32) -> (i32, i32) {
    %c0_i32 = arith.constant 0 : i32
    %c0_i32_0 = arith.constant 0 : i32
    %c0_i32_1 = arith.constant 0 : i32
    return %c0_i32, %c0_i32_0 : i32, i32
  }
  func.func @transform_13(%arg0: i32, %arg1: i32) -> (i32, i32) {
    %c0_i32 = arith.constant 0 : i32
    %c0_i32_0 = arith.constant 0 : i32
    %c0_i32_1 = arith.constant 0 : i32
    return %c0_i32, %c0_i32_0 : i32, i32
  }
  func.func @transform_14(%arg0: i32, %arg1: i32) -> (i32, i32, i32) {
    %c0_i32 = arith.constant 0 : i32
    %c0_i32_0 = arith.constant 0 : i32
    return %arg0, %arg1, %c0_i32 : i32, i32, i32
  }
}

</mosaic_0001>

<llo_original>
// kernel: tpu_custom_call.1
$region0: #{tpu_custom_call.1}
  #allocation0 [shape = 'u32[]', space=smem, size = 0x4, offset = 0x4, fixed_abs, tag = 'smem constant byte address 0x4 - core index']
  #allocation1 [shape = 'u32[144,128]{1,0:T(1,128)}', space=vmem, size = 0x12000, scoped, tag = 'internal scratch']
  #allocation2 [shape = 'f32[8,32]{1,0:T(8,128)}', space=vmem, size = 0x1000, scoped, tag = 'scratch operand']
  #allocation3 [shape = 'f32[8,32]{1,0:T(8,128)}', space=vmem, size = 0x1000, scoped, tag = 'scratch operand']
  %s0 = inlined_call_operand.hbm [shape: f32[2,8,32], index: 0, kind: input, shape index: {}]
  %s1 = inlined_call_operand.hbm [shape: f32[2,8,32], index: 1, kind: input, shape index: {}]
  %s2 = inlined_call_operand.hbm [shape: f32[2,8,32], index: 2, kind: input, shape index: {}]
  %s3 = inlined_call_operand.vmem [shape: f32[32,32], index: 3, kind: input, shape index: {}]
  %s4 = inlined_call_operand.vmem [shape: f32[32,32], index: 4, kind: input, shape index: {}]
  %s5 = inlined_call_operand.vmem [shape: f32[32,32], index: 5, kind: input, shape index: {}]
  %s6 = inlined_call_operand.vmem [shape: f32[32,32], index: 6, kind: input, shape index: {}]
  %s7 = inlined_call_operand.vmem [shape: f32[1,32], index: 7, kind: input, shape index: {}]
  %s8 = inlined_call_operand.vmem [shape: f32[1,32], index: 8, kind: input, shape index: {}]
  %s9 = inlined_call_operand.vmem [shape: f32[1,32], index: 9, kind: input, shape index: {}]
  %s10 = inlined_call_operand.vmem [shape: f32[32,128], index: 10, kind: input, shape index: {}]
  %s11 = inlined_call_operand.vmem [shape: f32[1,128], index: 11, kind: input, shape index: {}]
  %s12 = inlined_call_operand.vmem [shape: f32[128,32], index: 12, kind: input, shape index: {}]
  %s13 = inlined_call_operand.vmem [shape: f32[1,32], index: 13, kind: input, shape index: {}]
  %s14 = inlined_call_operand.hbm [shape: f32[2,8,32], index: 14, kind: output, shape index: {}]
  %s15 = sld [smem:[#allocation0]]
  $region105: #{tpu_custom_call.1} parent=0
    _
  %s17 = ssub.s32 1, %s15
  %s18 = scalar_select 0, %s17, %s15
  $region1: #{tpu_custom_call.1} parent=0
    #allocation4 [shape = 'u8[8192]{0}', space=vmem, size = 0x2000, scoped, tag = 'input window, operand 0']
    #allocation5 [shape = 's32[2]{0}', space=sflag, size = 0x8, scoped, tag = 'scoped memory for tpu_custom_call.1']
    #allocation6 [shape = 's32[2]{0}', space=sflag, size = 0x8, scoped, tag = 'scoped memory for tpu_custom_call.1']
    #allocation7 [shape = 'u8[8192]{0}', space=vmem, size = 0x2000, scoped, tag = 'input window, operand 1']
    #allocation8 [shape = 's32[2]{0}', space=sflag, size = 0x8, scoped, tag = 'scoped memory for tpu_custom_call.1']
    #allocation9 [shape = 'u8[8192]{0}', space=vmem, size = 0x2000, scoped, tag = 'input window, operand 2']
    #allocation10 [shape = 'u8[8192]{0}', space=vmem, size = 0x2000, scoped, tag = 'output window, operand 0']
    %19 = vsyncpa [#allocation5], 0
    %s20 = scalar_lea.sflag [#allocation5], 1
    %21 = vsyncpa %s20, 0
    %22 = vsyncpa [#allocation8], 0
    %s23 = scalar_lea.sflag [#allocation8], 1
    %24 = vsyncpa %s23, 0
    %25 = vsyncpa [#allocation6], 0
    %s26 = scalar_lea.sflag [#allocation6], 1
    %27 = vsyncpa %s26, 0
    loop: start=0, step=1, limit=4
    $region2: #{tpu_custom_call.1} parent=1 // loop_pre_header
      _
    $region3: #{tpu_custom_call.1} parent=1 // loop_header
      %s29 = sphi 0, %s33
      %p30 = scmp.ge.s32.totalorder %s29, 4
      %s36 = sphi 0, %s48
      %s37 = sphi 0, %s44
      %s38 = sphi 0, %s36
      %s39 = sphi 0, %s37
      %s40 = sphi 0, %s38
      %s41 = sphi 0, %s39
      %s51 = sphi 0, %s53
      %s54 = sphi 0, %s51
      %s55 = sphi 0, %s54
      %s71 = sphi 0, %s55
      %s79 = sphi 0, %s81
      %s82 = sphi 0, %s79
      %s83 = sphi 0, %s82
      %s99 = sphi 0, %s83
      %s105 = sphi 0, %s107
      %s108 = sphi 0, %s105
      %s109 = sphi 0, %s108
      %s125 = sphi 0, %s109
      %s129 = sphi 0, %s129
      %s131 = sphi 0, %s129
      %s132 = sphi 0, %s131
      %s146 = sphi 0, %s132
      %s150 = sphi 0, %s150
      %s152 = sphi 0, %s150
      %s153 = sphi 0, %s152
      %s167 = sphi 0, %s153
      %s171 = sphi 0, %s171
      %s173 = sphi 0, %s171
      %s174 = sphi 0, %s173
      %s188 = sphi 0, %s174
      %s192 = sphi 0, %s192
      %s194 = sphi 0, %s192
      %s195 = sphi 0, %s194
      %s209 = sphi 0, %s195
      %s213 = sphi 0, %s213
      %s215 = sphi 0, %s213
      %s216 = sphi 0, %s215
      %s230 = sphi 0, %s216
      %s234 = sphi 0, %s234
      %s236 = sphi 0, %s234
      %s237 = sphi 0, %s236
      %s251 = sphi 0, %s237
      %s255 = sphi 0, %s255
      %s257 = sphi 0, %s255
      %s258 = sphi 0, %s257
      %s272 = sphi 0, %s258
      %s276 = sphi 0, %s276
      %s278 = sphi 0, %s276
      %s279 = sphi 0, %s278
      %s293 = sphi 0, %s279
      %s297 = sphi 0, %s297
      %s299 = sphi 0, %s297
      %s300 = sphi 0, %s299
      %s314 = sphi 0, %s300
      %s318 = sphi 0, %s318
      %s320 = sphi 0, %s318
      %s321 = sphi 0, %s320
      %s335 = sphi 0, %s321
      %s339 = sphi 0, %s339
      %s341 = sphi 0, %s339
      %s342 = sphi 0, %s341
      %s356 = sphi 0, %s342
      %s364 = sphi 0, %s366
      %s367 = sphi 0, %s364
      %s368 = sphi 0, %s367
      %s384 = sphi 0, %s368
    $region4: #{tpu_custom_call.1} parent=1 // loop_header_branch
      %32 = sbr.rel (%p30) target = $region8
    $region5: #{tpu_custom_call.1} parent=1 // loop_body
      %s34 = ssub.s32 %s29, 1
      %s35 = ssub.s32 %s29, 2
      %s42 = sadd.s32 1, %s37
      %p43 = scmp.ge.s32.totalorder %s42, 1
      %s44 = scalar_select %p43, 0, %s42
      %s45 = sadd.s32 1, %s36
      %s46 = scalar_select %p43, %s45, %s36
      %p47 = scmp.ge.s32.totalorder %s46, 2
      %s48 = scalar_select %p47, 0, %s46
      %s49 = ssub.s32 %s36, %s48
      %p50 = scmp.eq.s32.totalorder %s49, 0
      %s52 = sadd.s32 %s51, 1
      %s53 = scalar_select %p50, %s51, %s52
      %p56 = pneg %p50
      %p57 = scmp.eq.s32.totalorder %s29, 1
      %p58 = por %p56, %p57
      %p59 = scmp.ne.s32.totalorder %s51, %s54
      %p60 = scmp.eq.s32.totalorder %s29, 0
      %p61 = por %p59, %p60
      %p62 = scmp.ne.s32.totalorder %s51, %s54
      %p63 = scmp.eq.s32.totalorder %s34, 1
      %p64 = por %p62, %p63
      %p65 = scmp.ne.s32.totalorder %s54, %s55
      %p66 = scmp.eq.s32.totalorder %s34, 0
      %p67 = por %p65, %p66
      %p68 = scmp.ne.s32.totalorder %s54, %s55
      %p69 = scmp.eq.s32.totalorder %s35, 1
      %p70 = por %p68, %p69
      %p72 = scmp.ne.s32.totalorder %s55, %s71
      %p73 = scmp.eq.s32.totalorder %s35, 0
      %p74 = por %p72, %p73
      %s75 = ssub.s32 %s36, %s48
      %s76 = ssub.s32 %s37, %s44
      %s77 = sor.u32 %s75, %s76
      %p78 = scmp.eq.s32.totalorder %s77, 0
      %s80 = sadd.s32 %s79, 1
      %s81 = scalar_select %p78, %s79, %s80
      %p84 = pneg %p78
      %p85 = scmp.eq.s32.totalorder %s29, 1
      %p86 = por %p84, %p85
      %p87 = scmp.ne.s32.totalorder %s79, %s82
      %p88 = scmp.eq.s32.totalorder %s29, 0
      %p89 = por %p87, %p88
      %p90 = scmp.ne.s32.totalorder %s79, %s82
      %p91 = scmp.eq.s32.totalorder %s34, 1
      %p92 = por %p90, %p91
      %p93 = scmp.ne.s32.totalorder %s82, %s83
      %p94 = scmp.eq.s32.totalorder %s34, 0
      %p95 = por %p93, %p94
      %p96 = scmp.ne.s32.totalorder %s82, %s83
      %p97 = scmp.eq.s32.totalorder %s35, 1
      %p98 = por %p96, %p97
      %p100 = scmp.ne.s32.totalorder %s83, %s99
      %p101 = scmp.eq.s32.totalorder %s35, 0
      %p102 = por %p100, %p101
      %s103 = ssub.s32 %s36, %s48
      %p104 = scmp.eq.s32.totalorder %s103, 0
      %s106 = sadd.s32 %s105, 1
      %s107 = scalar_select %p104, %s105, %s106
      %p110 = pneg %p104
      %p111 = scmp.eq.s32.totalorder %s29, 1
      %p112 = por %p110, %p111
      %p113 = scmp.ne.s32.totalorder %s105, %s108
      %p114 = scmp.eq.s32.totalorder %s29, 0
      %p115 = por %p113, %p114
      %p116 = scmp.ne.s32.totalorder %s105, %s108
      %p117 = scmp.eq.s32.totalorder %s34, 1
      %p118 = por %p116, %p117
      %p119 = scmp.ne.s32.totalorder %s108, %s109
      %p120 = scmp.eq.s32.totalorder %s34, 0
      %p121 = por %p119, %p120
      %p122 = scmp.ne.s32.totalorder %s108, %s109
      %p123 = scmp.eq.s32.totalorder %s35, 1
      %p124 = por %p122, %p123
      %p126 = scmp.ne.s32.totalorder %s109, %s125
      %p127 = scmp.eq.s32.totalorder %s35, 0
      %p128 = por %p126, %p127
      %s130 = sadd.s32 %s129, 1
      %p133 = scmp.eq.s32.totalorder %s29, 1
      %p134 = scmp.ne.s32.totalorder %s129, %s131
      %p135 = scmp.eq.s32.totalorder %s29, 0
      %p136 = por %p134, %p135
      %p137 = scmp.ne.s32.totalorder %s129, %s131
      %p138 = scmp.eq.s32.totalorder %s34, 1
      %p139 = por %p137, %p138
      %p140 = scmp.ne.s32.totalorder %s131, %s132
      %p141 = scmp.eq.s32.totalorder %s34, 0
      %p142 = por %p140, %p141
      %p143 = scmp.ne.s32.totalorder %s131, %s132
      %p144 = scmp.eq.s32.totalorder %s35, 1
      %p145 = por %p143, %p144
      %p147 = scmp.ne.s32.totalorder %s132, %s146
      %p148 = scmp.eq.s32.totalorder %s35, 0
      %p149 = por %p147, %p148
      %s151 = sadd.s32 %s150, 1
      %p154 = scmp.eq.s32.totalorder %s29, 1
      %p155 = scmp.ne.s32.totalorder %s150, %s152
      %p156 = scmp.eq.s32.totalorder %s29, 0
      %p157 = por %p155, %p156
      %p158 = scmp.ne.s32.totalorder %s150, %s152
      %p159 = scmp.eq.s32.totalorder %s34, 1
      %p160 = por %p158, %p159
      %p161 = scmp.ne.s32.totalorder %s152, %s153
      %p162 = scmp.eq.s32.totalorder %s34, 0
      %p163 = por %p161, %p162
      %p164 = scmp.ne.s32.totalorder %s152, %s153
      %p165 = scmp.eq.s32.totalorder %s35, 1
      %p166 = por %p164, %p165
      %p168 = scmp.ne.s32.totalorder %s153, %s167
      %p169 = scmp.eq.s32.totalorder %s35, 0
      %p170 = por %p168, %p169
      %s172 = sadd.s32 %s171, 1
      %p175 = scmp.eq.s32.totalorder %s29, 1
      %p176 = scmp.ne.s32.totalorder %s171, %s173
      %p177 = scmp.eq.s32.totalorder %s29, 0
      %p178 = por %p176, %p177
      %p179 = scmp.ne.s32.totalorder %s171, %s173
      %p180 = scmp.eq.s32.totalorder %s34, 1
      %p181 = por %p179, %p180
      %p182 = scmp.ne.s32.totalorder %s173, %s174
      %p183 = scmp.eq.s32.totalorder %s34, 0
      %p184 = por %p182, %p183
      %p185 = scmp.ne.s32.totalorder %s173, %s174
      %p186 = scmp.eq.s32.totalorder %s35, 1
      %p187 = por %p185, %p186
      %p189 = scmp.ne.s32.totalorder %s174, %s188
      %p190 = scmp.eq.s32.totalorder %s35, 0
      %p191 = por %p189, %p190
      %s193 = sadd.s32 %s192, 1
      %p196 = scmp.eq.s32.totalorder %s29, 1
      %p197 = scmp.ne.s32.totalorder %s192, %s194
      %p198 = scmp.eq.s32.totalorder %s29, 0
      %p199 = por %p197, %p198
      %p200 = scmp.ne.s32.totalorder %s192, %s194
      %p201 = scmp.eq.s32.totalorder %s34, 1
      %p202 = por %p200, %p201
      %p203 = scmp.ne.s32.totalorder %s194, %s195
      %p204 = scmp.eq.s32.totalorder %s34, 0
      %p205 = por %p203, %p204
      %p206 = scmp.ne.s32.totalorder %s194, %s195
      %p207 = scmp.eq.s32.totalorder %s35, 1
      %p208 = por %p206, %p207
      %p210 = scmp.ne.s32.totalorder %s195, %s209
      %p211 = scmp.eq.s32.totalorder %s35, 0
      %p212 = por %p210, %p211
      %s214 = sadd.s32 %s213, 1
      %p217 = scmp.eq.s32.totalorder %s29, 1
      %p218 = scmp.ne.s32.totalorder %s213, %s215
      %p219 = scmp.eq.s32.totalorder %s29, 0
      %p220 = por %p218, %p219
      %p221 = scmp.ne.s32.totalorder %s213, %s215
      %p222 = scmp.eq.s32.totalorder %s34, 1
      %p223 = por %p221, %p222
      %p224 = scmp.ne.s32.totalorder %s215, %s216
      %p225 = scmp.eq.s32.totalorder %s34, 0
      %p226 = por %p224, %p225
      %p227 = scmp.ne.s32.totalorder %s215, %s216
      %p228 = scmp.eq.s32.totalorder %s35, 1
      %p229 = por %p227, %p228
      %p231 = scmp.ne.s32.totalorder %s216, %s230
      %p232 = scmp.eq.s32.totalorder %s35, 0
      %p233 = por %p231, %p232
      %s235 = sadd.s32 %s234, 1
      %p238 = scmp.eq.s32.totalorder %s29, 1
      %p239 = scmp.ne.s32.totalorder %s234, %s236
      %p240 = scmp.eq.s32.totalorder %s29, 0
      %p241 = por %p239, %p240
      %p242 = scmp.ne.s32.totalorder %s234, %s236
      %p243 = scmp.eq.s32.totalorder %s34, 1
      %p244 = por %p242, %p243
      %p245 = scmp.ne.s32.totalorder %s236, %s237
      %p246 = scmp.eq.s32.totalorder %s34, 0
      %p247 = por %p245, %p246
      %p248 = scmp.ne.s32.totalorder %s236, %s237
      %p249 = scmp.eq.s32.totalorder %s35, 1
      %p250 = por %p248, %p249
      %p252 = scmp.ne.s32.totalorder %s237, %s251
      %p253 = scmp.eq.s32.totalorder %s35, 0
      %p254 = por %p252, %p253
      %s256 = sadd.s32 %s255, 1
      %p259 = scmp.eq.s32.totalorder %s29, 1
      %p260 = scmp.ne.s32.totalorder %s255, %s257
      %p261 = scmp.eq.s32.totalorder %s29, 0
      %p262 = por %p260, %p261
      %p263 = scmp.ne.s32.totalorder %s255, %s257
      %p264 = scmp.eq.s32.totalorder %s34, 1
      %p265 = por %p263, %p264
      %p266 = scmp.ne.s32.totalorder %s257, %s258
      %p267 = scmp.eq.s32.totalorder %s34, 0
      %p268 = por %p266, %p267
      %p269 = scmp.ne.s32.totalorder %s257, %s258
      %p270 = scmp.eq.s32.totalorder %s35, 1
      %p271 = por %p269, %p270
      %p273 = scmp.ne.s32.totalorder %s258, %s272
      %p274 = scmp.eq.s32.totalorder %s35, 0
      %p275 = por %p273, %p274
      %s277 = sadd.s32 %s276, 1
      %p280 = scmp.eq.s32.totalorder %s29, 1
      %p281 = scmp.ne.s32.totalorder %s276, %s278
      %p282 = scmp.eq.s32.totalorder %s29, 0
      %p283 = por %p281, %p282
      %p284 = scmp.ne.s32.totalorder %s276, %s278
      %p285 = scmp.eq.s32.totalorder %s34, 1
      %p286 = por %p284, %p285
      %p287 = scmp.ne.s32.totalorder %s278, %s279
      %p288 = scmp.eq.s32.totalorder %s34, 0
      %p289 = por %p287, %p288
      %p290 = scmp.ne.s32.totalorder %s278, %s279
      %p291 = scmp.eq.s32.totalorder %s35, 1
      %p292 = por %p290, %p291
      %p294 = scmp.ne.s32.totalorder %s279, %s293
      %p295 = scmp.eq.s32.totalorder %s35, 0
      %p296 = por %p294, %p295
      %s298 = sadd.s32 %s297, 1
      %p301 = scmp.eq.s32.totalorder %s29, 1
      %p302 = scmp.ne.s32.totalorder %s297, %s299
      %p303 = scmp.eq.s32.totalorder %s29, 0
      %p304 = por %p302, %p303
      %p305 = scmp.ne.s32.totalorder %s297, %s299
      %p306 = scmp.eq.s32.totalorder %s34, 1
      %p307 = por %p305, %p306
      %p308 = scmp.ne.s32.totalorder %s299, %s300
      %p309 = scmp.eq.s32.totalorder %s34, 0
      %p310 = por %p308, %p309
      %p311 = scmp.ne.s32.totalorder %s299, %s300
      %p312 = scmp.eq.s32.totalorder %s35, 1
      %p313 = por %p311, %p312
      %p315 = scmp.ne.s32.totalorder %s300, %s314
      %p316 = scmp.eq.s32.totalorder %s35, 0
      %p317 = por %p315, %p316
      %s319 = sadd.s32 %s318, 1
      %p322 = scmp.eq.s32.totalorder %s29, 1
      %p323 = scmp.ne.s32.totalorder %s318, %s320
      %p324 = scmp.eq.s32.totalorder %s29, 0
      %p325 = por %p323, %p324
      %p326 = scmp.ne.s32.totalorder %s318, %s320
      %p327 = scmp.eq.s32.totalorder %s34, 1
      %p328 = por %p326, %p327
      %p329 = scmp.ne.s32.totalorder %s320, %s321
      %p330 = scmp.eq.s32.totalorder %s34, 0
      %p331 = por %p329, %p330
      %p332 = scmp.ne.s32.totalorder %s320, %s321
      %p333 = scmp.eq.s32.totalorder %s35, 1
      %p334 = por %p332, %p333
      %p336 = scmp.ne.s32.totalorder %s321, %s335
      %p337 = scmp.eq.s32.totalorder %s35, 0
      %p338 = por %p336, %p337
      %s340 = sadd.s32 %s339, 1
      %p343 = scmp.eq.s32.totalorder %s29, 1
      %p344 = scmp.ne.s32.totalorder %s339, %s341
      %p345 = scmp.eq.s32.totalorder %s29, 0
      %p346 = por %p344, %p345
      %p347 = scmp.ne.s32.totalorder %s339, %s341
      %p348 = scmp.eq.s32.totalorder %s34, 1
      %p349 = por %p347, %p348
      %p350 = scmp.ne.s32.totalorder %s341, %s342
      %p351 = scmp.eq.s32.totalorder %s34, 0
      %p352 = por %p350, %p351
      %p353 = scmp.ne.s32.totalorder %s341, %s342
      %p354 = scmp.eq.s32.totalorder %s35, 1
      %p355 = por %p353, %p354
      %p357 = scmp.ne.s32.totalorder %s342, %s356
      %p358 = scmp.eq.s32.totalorder %s35, 0
      %p359 = por %p357, %p358
      %s360 = ssub.s32 %s36, %s48
      %s361 = ssub.s32 %s37, %s44
      %s362 = sor.u32 %s360, %s361
      %p363 = scmp.eq.s32.totalorder %s362, 0
      %s365 = sadd.s32 %s364, 1
      %s366 = scalar_select %p363, %s364, %s365
      %p369 = pneg %p363
      %p370 = scmp.eq.s32.totalorder %s29, 1
      %p371 = por %p369, %p370
      %p372 = scmp.ne.s32.totalorder %s364, %s367
      %p373 = scmp.eq.s32.totalorder %s29, 0
      %p374 = por %p372, %p373
      %p375 = scmp.ne.s32.totalorder %s364, %s367
      %p376 = scmp.eq.s32.totalorder %s34, 1
      %p377 = por %p375, %p376
      %p378 = scmp.ne.s32.totalorder %s367, %s368
      %p379 = scmp.eq.s32.totalorder %s34, 0
      %p380 = por %p378, %p379
      %p381 = scmp.ne.s32.totalorder %s367, %s368
      %p382 = scmp.eq.s32.totalorder %s35, 1
      %p383 = por %p381, %p382
      %p385 = scmp.ne.s32.totalorder %s368, %s384
      %p386 = scmp.eq.s32.totalorder %s35, 0
      %p387 = por %p385, %p386
      %p388 = scmp.le.s32.totalorder 1, %s29
      %p389 = scmp.lt.s32.totalorder %s29, 3
      %p390 = pnand %p388, %p389
      %p391 = pneg %p390
      // Predicated region
      $region9: #{tpu_custom_call.1} parent=5 // pred_check
        _
      $region10: #{tpu_custom_call.1} parent=5 // pred_check_branch
        %393 = sbr.rel (%p390) target = $region12
      $region11: #{tpu_custom_call.1} parent=5 // pred_region
        %s394 = ssub.s32 %s29, 1
        // Predicated region
        $region13: #{tpu_custom_call.1} parent=11 // pred_check
          %p395 = pneg %p142
        $region14: #{tpu_custom_call.1} parent=11 // pred_check_branch
          %397 = sbr.rel (%p395) target = $region16
        $region15: #{tpu_custom_call.1} parent=11 // pred_region
          _
        $region16: #{tpu_custom_call.1} parent=11 // pred_fallthru
          _
        // Predicated region
        $region17: #{tpu_custom_call.1} parent=11 // pred_check
          %p398 = pneg %p163
        $region18: #{tpu_custom_call.1} parent=11 // pred_check_branch
          %400 = sbr.rel (%p398) target = $region20
        $region19: #{tpu_custom_call.1} parent=11 // pred_region
          _
        $region20: #{tpu_custom_call.1} parent=11 // pred_fallthru
          _
        // Predicated region
        $region21: #{tpu_custom_call.1} parent=11 // pred_check
          %p401 = pneg %p184
        $region22: #{tpu_custom_call.1} parent=11 // pred_check_branch
          %403 = sbr.rel (%p401) target = $region24
        $region23: #{tpu_custom_call.1} parent=11 // pred_region
          _
        $region24: #{tpu_custom_call.1} parent=11 // pred_fallthru
          _
        // Predicated region
        $region25: #{tpu_custom_call.1} parent=11 // pred_check
          %p404 = pneg %p205
        $region26: #{tpu_custom_call.1} parent=11 // pred_check_branch
          %406 = sbr.rel (%p404) target = $region28
        $region27: #{tpu_custom_call.1} parent=11 // pred_region
          _
        $region28: #{tpu_custom_call.1} parent=11 // pred_fallthru
          _
        // Predicated region
        $region29: #{tpu_custom_call.1} parent=11 // pred_check
          %p407 = pneg %p226
        $region30: #{tpu_custom_call.1} parent=11 // pred_check_branch
          %409 = sbr.rel (%p407) target = $region32
        $region31: #{tpu_custom_call.1} parent=11 // pred_region
          _
        $region32: #{tpu_custom_call.1} parent=11 // pred_fallthru
          _
        // Predicated region
        $region33: #{tpu_custom_call.1} parent=11 // pred_check
          %p410 = pneg %p247
        $region34: #{tpu_custom_call.1} parent=11 // pred_check_branch
          %412 = sbr.rel (%p410) target = $region36
        $region35: #{tpu_custom_call.1} parent=11 // pred_region
          _
        $region36: #{tpu_custom_call.1} parent=11 // pred_fallthru
          _
        // Predicated region
        $region37: #{tpu_custom_call.1} parent=11 // pred_check
          %p413 = pneg %p268
        $region38: #{tpu_custom_call.1} parent=11 // pred_check_branch
          %415 = sbr.rel (%p413) target = $region40
        $region39: #{tpu_custom_call.1} parent=11 // pred_region
          _
        $region40: #{tpu_custom_call.1} parent=11 // pred_fallthru
          _
        // Predicated region
        $region41: #{tpu_custom_call.1} parent=11 // pred_check
          %p416 = pneg %p289
        $region42: #{tpu_custom_call.1} parent=11 // pred_check_branch
          %418 = sbr.rel (%p416) target = $region44
        $region43: #{tpu_custom_call.1} parent=11 // pred_region
          _
        $region44: #{tpu_custom_call.1} parent=11 // pred_fallthru
          _
        // Predicated region
        $region45: #{tpu_custom_call.1} parent=11 // pred_check
          %p419 = pneg %p310
        $region46: #{tpu_custom_call.1} parent=11 // pred_check_branch
          %421 = sbr.rel (%p419) target = $region48
        $region47: #{tpu_custom_call.1} parent=11 // pred_region
          _
        $region48: #{tpu_custom_call.1} parent=11 // pred_fallthru
          _
        // Predicated region
        $region49: #{tpu_custom_call.1} parent=11 // pred_check
          %p422 = pneg %p331
        $region50: #{tpu_custom_call.1} parent=11 // pred_check_branch
          %424 = sbr.rel (%p422) target = $region52
        $region51: #{tpu_custom_call.1} parent=11 // pred_region
          _
        $region52: #{tpu_custom_call.1} parent=11 // pred_fallthru
          _
        // Predicated region
        $region53: #{tpu_custom_call.1} parent=11 // pred_check
          %p425 = pneg %p352
        $region54: #{tpu_custom_call.1} parent=11 // pred_check_branch
          %427 = sbr.rel (%p425) target = $region56
        $region55: #{tpu_custom_call.1} parent=11 // pred_region
          _
        $region56: #{tpu_custom_call.1} parent=11 // pred_fallthru
          _
      $region12: #{tpu_custom_call.1} parent=5 // pred_fallthru
        _
      %p428 = scmp.lt.s32.totalorder %s29, 2
      // Predicated region
      $region57: #{tpu_custom_call.1} parent=5 // pred_check
        %p429 = pneg %p428
      $region58: #{tpu_custom_call.1} parent=5 // pred_check_branch
        %431 = sbr.rel (%p429) target = $region60
      $region59: #{tpu_custom_call.1} parent=5 // pred_region
        // Predicated region
        $region61: #{tpu_custom_call.1} parent=59 // pred_check
          %p432 = pneg %p61
        $region62: #{tpu_custom_call.1} parent=59 // pred_check_branch
          %434 = sbr.rel (%p432) target = $region64
        $region63: #{tpu_custom_call.1} parent=59 // pred_region
          %s435 = sand.u32 %s51, 1
          %s436 = scalar_lea.sflag [#allocation5], %s435
          %s437 = sand.u32 %s51, 1
          %s438 = smul.addr %s437, 8
          %s439 = scalar_lea.vmem [#allocation4], %s438
          %s441 = ssub.s32 128, 128
          %442 = vsyncadd %s436, %s441
          %s443 = smul.addr %s36, 128
          %s444 = scalar_lea.hbm %s0, %s443
          %s446 = sshll.u32 %s439, 4
          %s447 = int_to_ptr.vmem [resolvable:$true] %s446
          %449 = dma.hbm_to_vmem [thread:$0]  %s444, 128, %s447, %s436
        $region64: #{tpu_custom_call.1} parent=59 // pred_fallthru
          _
        // Predicated region
        $region65: #{tpu_custom_call.1} parent=59 // pred_check
          %p450 = pneg %p89
        $region66: #{tpu_custom_call.1} parent=59 // pred_check_branch
          %452 = sbr.rel (%p450) target = $region68
        $region67: #{tpu_custom_call.1} parent=59 // pred_region
          %s453 = sand.u32 %s29, 1
          %s454 = scalar_lea.sflag [#allocation8], %s453
          %s455 = sand.u32 %s79, 1
          %s456 = smul.addr %s455, 8
          %s457 = scalar_lea.vmem [#allocation7], %s456
          %s459 = ssub.s32 128, 128
          %460 = vsyncadd %s454, %s459
          %s461 = sadd.s32 %s37, %s36
          %s462 = smul.addr %s461, 128
          %s463 = scalar_lea.hbm %s1, %s462
          %s465 = sshll.u32 %s457, 4
          %s466 = int_to_ptr.vmem [resolvable:$true] %s465
          %468 = dma.hbm_to_vmem [thread:$0]  %s463, 128, %s466, %s454
        $region68: #{tpu_custom_call.1} parent=59 // pred_fallthru
          _
        // Predicated region
        $region69: #{tpu_custom_call.1} parent=59 // pred_check
          %p469 = pneg %p115
        $region70: #{tpu_custom_call.1} parent=59 // pred_check_branch
          %471 = sbr.rel (%p469) target = $region72
        $region71: #{tpu_custom_call.1} parent=59 // pred_region
          %s472 = sand.u32 %s29, 1
          %s473 = scalar_lea.sflag [#allocation8], %s472
          %s474 = sand.u32 %s105, 1
          %s475 = smul.addr %s474, 8
          %s476 = scalar_lea.vmem [#allocation9], %s475
          %s478 = ssub.s32 128, 128
          %479 = vsyncadd %s473, %s478
          %s480 = smul.addr %s36, 128
          %s481 = scalar_lea.hbm %s2, %s480
          %s483 = sshll.u32 %s476, 4
          %s484 = int_to_ptr.vmem [resolvable:$true] %s483
          %486 = dma.hbm_to_vmem [thread:$0]  %s481, 128, %s484, %s473
        $region72: #{tpu_custom_call.1} parent=59 // pred_fallthru
          _
      $region60: #{tpu_custom_call.1} parent=5 // pred_fallthru
        _
      %p487 = scmp.le.s32.totalorder 1, %s29
      %p488 = scmp.lt.s32.totalorder %s29, 3
      %p489 = pnand %p487, %p488
      %p490 = pneg %p489
      // Predicated region
      $region73: #{tpu_custom_call.1} parent=5 // pred_check
        _
      $region74: #{tpu_custom_call.1} parent=5 // pred_check_branch
        %492 = sbr.rel (%p489) target = $region76
      $region75: #{tpu_custom_call.1} parent=5 // pred_region
        %s493 = ssub.s32 %s29, 1
        %s494 = sand.u32 %s54, 1
        %s495 = scalar_lea.sflag [#allocation5], %s494
        %s496 = sand.u32 %s54, 1
        %s497 = smul.addr %s496, 8
        %s498 = scalar_lea.vmem [#allocation4], %s497
        // Predicated region
        $region77: #{tpu_custom_call.1} parent=75 // pred_check
          %p499 = pneg %p67
        $region78: #{tpu_custom_call.1} parent=75 // pred_check_branch
          %501 = sbr.rel (%p499) target = $region80
        $region79: #{tpu_custom_call.1} parent=75 // pred_region
          %502 = dma.done %s495, 128
        $region80: #{tpu_custom_call.1} parent=75 // pred_fallthru
          _
        %s503 = sand.u32 %s34, 1
        %s504 = scalar_lea.sflag [#allocation8], %s503
        %s505 = sand.u32 %s82, 1
        %s506 = smul.addr %s505, 8
        %s507 = scalar_lea.vmem [#allocation7], %s506
        // Predicated region
        $region81: #{tpu_custom_call.1} parent=75 // pred_check
          %p508 = pneg %p95
        $region82: #{tpu_custom_call.1} parent=75 // pred_check_branch
          %510 = sbr.rel (%p508) target = $region84
        $region83: #{tpu_custom_call.1} parent=75 // pred_region
          %511 = dma.done %s504, 128
        $region84: #{tpu_custom_call.1} parent=75 // pred_fallthru
          _
        %s512 = sand.u32 %s34, 1
        %s513 = scalar_lea.sflag [#allocation8], %s512
        %s514 = sand.u32 %s108, 1
        %s515 = smul.addr %s514, 8
        %s516 = scalar_lea.vmem [#allocation9], %s515
        // Predicated region
        $region85: #{tpu_custom_call.1} parent=75 // pred_check
          %p517 = pneg %p121
        $region86: #{tpu_custom_call.1} parent=75 // pred_check_branch
          %519 = sbr.rel (%p517) target = $region88
        $region87: #{tpu_custom_call.1} parent=75 // pred_region
          %520 = dma.done %s513, 128
        $region88: #{tpu_custom_call.1} parent=75 // pred_fallthru
          _
        %s521 = sand.u32 %s54, 1
        %s522 = scalar_lea.sflag [#allocation5], %s521
        %s523 = sand.u32 %s54, 1
        %s524 = smul.addr %s523, 8
        %s525 = scalar_lea.vmem [#allocation4], %s524
        %p526 = pneg %p67
        %p527 = pneg %p64
        %s528 = sand.u32 %s34, 1
        %s529 = scalar_lea.sflag [#allocation8], %s528
        %s530 = sand.u32 %s82, 1
        %s531 = smul.addr %s530, 8
        %s532 = scalar_lea.vmem [#allocation7], %s531
        %p533 = pneg %p95
        %p534 = pneg %p92
        %s535 = sand.u32 %s34, 1
        %s536 = scalar_lea.sflag [#allocation8], %s535
        %s537 = sand.u32 %s108, 1
        %s538 = smul.addr %s537, 8
        %s539 = scalar_lea.vmem [#allocation9], %s538
        %p540 = pneg %p121
        %p541 = pneg %p118
        %p542 = pneg %p142
        %p543 = pneg %p139
        %p544 = pneg %p163
        %p545 = pneg %p160
        %p546 = pneg %p184
        %p547 = pneg %p181
        %p548 = pneg %p205
        %p549 = pneg %p202
        %p550 = pneg %p226
        %p551 = pneg %p223
        %p552 = pneg %p247
        %p553 = pneg %p244
        %p554 = pneg %p268
        %p555 = pneg %p265
        %p556 = pneg %p289
        %p557 = pneg %p286
        %p558 = pneg %p310
        %p559 = pneg %p307
        %p560 = pneg %p331
        %p561 = pneg %p328
        %p562 = pneg %p352
        %p563 = pneg %p349
        %p564 = pneg %p380
        %p565 = pneg %p377
        %s566 = sand.u32 %s367, 1
        %s567 = scalar_lea.sflag [#allocation6], %s566
        %s568 = sand.u32 %s367, 1
        %s569 = smul.addr %s568, 8
        %s570 = scalar_lea.vmem [#allocation10], %s569
        %p571 = scmp.eq.s32.totalorder %s39, 0
        // Predicated region
        $region89: #{tpu_custom_call.1} parent=75 // pred_check
          %p572 = pneg %p571
        $region90: #{tpu_custom_call.1} parent=75 // pred_check_branch
          %574 = sbr.rel (%p572) target = $region92
        $region91: #{tpu_custom_call.1} parent=75 // pred_region
          %v575 = vld [vmem:[%s498] sm:$0xff]
          %v576 = vld [vmem:[%s516] sm:$0xff]
          %v577 = vld [vmem:[%s4] sm:$0xff]
          %v578 = vld [vmem:[%s4 + $0x8] sm:$0xff]
          %v579 = vld [vmem:[%s4 + $0x10] sm:$0xff]
          %v580 = vld [vmem:[%s4 + $0x18] sm:$0xff]
          %vm581 = vcmask 261120
          %v583 = vsel %vm581, %v575, 0
          %585 = vmatprep.subr.mxu0 0.0
          %586 = vmatpush1.msra.mxu0 0.0
          %587 = vmatprep.subr.mxu0 0.0
          %588 = vmatpush1.msra.mxu0 0.0
          %589 = vmatprep.subr.mxu0 0.0
          %590 = vmatpush1.msra.mxu0 0.0
          %591 = vmatprep.subr.mxu0 0.0
          %592 = vmatpush1.msra.mxu0 0.0
          %593 = vmatprep.subr.mxu0 0.0
          %594 = vmatpush1.msra.mxu0 0.0
          %595 = vmatprep.subr.mxu0 0.0
          %596 = vmatpush1.msra.mxu0 0.0
          %597 = vmatprep.subr.mxu0 0.0
          %598 = vmatpush1.msra.mxu0 0.0
          %599 = vmatprep.subr.mxu0 0.0
          %600 = vmatpush1.msra.mxu0 0.0
          %601 = vmatprep.subr.mxu0 0.0
          %602 = vmatpush1.msra.mxu0 0.0
          %603 = vmatprep.subr.mxu0 0.0
          %604 = vmatpush1.msra.mxu0 0.0
          %605 = vmatprep.subr.mxu0 0.0
          %606 = vmatpush1.msra.mxu0 0.0
          %607 = vmatprep.subr.mxu0 0.0
          %608 = vmatpush1.msra.mxu0 0.0
          %609 = vmatprep.subr.mxu0 0.0
          %610 = vmatpush1.msra.mxu0 %v580
          %611 = vmatprep.subr.mxu0 0.0
          %612 = vmatpush1.msra.mxu0 %v579
          %613 = vmatprep.subr.mxu0 0.0
          %614 = vmatpush1.msra.mxu0 %v578
          %615 = vmatprep.subr.mxu0 0.0
          %616 = vmatpush1.msra.mxu0 %v577
          %617 = vmatprep.subr.mxu0 0.0
          %618 = vmatpush2.msra.mxu0 0.0
          %619 = vmatprep.subr.mxu0 0.0
          %620 = vmatpush2.msra.mxu0 0.0
          %621 = vmatprep.subr.mxu0 0.0
          %622 = vmatpush2.msra.mxu0 0.0
          %623 = vmatprep.subr.mxu0 0.0
          %624 = vmatpush2.msra.mxu0 0.0
          %625 = vmatprep.subr.mxu0 0.0
          %626 = vmatpush2.msra.mxu0 0.0
          %627 = vmatprep.subr.mxu0 0.0
          %628 = vmatpush2.msra.mxu0 0.0
          %629 = vmatprep.subr.mxu0 0.0
          %630 = vmatpush2.msra.mxu0 0.0
          %631 = vmatprep.subr.mxu0 0.0
          %632 = vmatpush2.msra.mxu0 0.0
          %633 = vmatprep.subr.mxu0 0.0
          %634 = vmatpush2.msra.mxu0 0.0
          %635 = vmatprep.subr.mxu0 0.0
          %636 = vmatpush2.msra.mxu0 0.0
          %637 = vmatprep.subr.mxu0 0.0
          %638 = vmatpush2.msra.mxu0 0.0
          %639 = vmatprep.subr.mxu0 0.0
          %640 = vmatpush2.msra.mxu0 0.0
          %641 = vmatprep.subr.mxu0 0.0
          %642 = vmatpush2.msra.mxu0 0.0
          %643 = vmatprep.subr.mxu0 0.0
          %644 = vmatpush2.msra.mxu0 0.0
          %645 = vmatprep.subr.mxu0 0.0
          %646 = vmatpush2.msra.mxu0 0.0
          %647 = vmatprep.subr.mxu0 0.0
          %648 = vmatpush2.msra.mxu0 0.0
          %649 = vmatprep.mubr.f32.mxu0 0.0
          %650 = vmatmul.mubr.f32.gmra.mxu0 %v583
          %v651 = vpop.f32.mrf.mxu0
          %v652 = vadd.f32 0.0, %v651
          %v653 = vpop.f32.mrf.mxu0
          %654 = vdwg.mxu0
          %655 = vst.msk [vmem:[#allocation2] sm:$0xff] %vm581, %v652
          %v656 = vld [vmem:[%s5] sm:$0xff]
          %v657 = vld [vmem:[%s5 + $0x8] sm:$0xff]
          %v658 = vld [vmem:[%s5 + $0x10] sm:$0xff]
          %v659 = vld [vmem:[%s5 + $0x18] sm:$0xff]
          %v661 = vsel %vm581, %v576, 0
          %663 = vmatprep.subr.mxu0 0.0
          %664 = vmatpush1.msra.mxu0 0.0
          %665 = vmatprep.subr.mxu0 0.0
          %666 = vmatpush1.msra.mxu0 0.0
          %667 = vmatprep.subr.mxu0 0.0
          %668 = vmatpush1.msra.mxu0 0.0
          %669 = vmatprep.subr.mxu0 0.0
          %670 = vmatpush1.msra.mxu0 0.0
          %671 = vmatprep.subr.mxu0 0.0
          %672 = vmatpush1.msra.mxu0 0.0
          %673 = vmatprep.subr.mxu0 0.0
          %674 = vmatpush1.msra.mxu0 0.0
          %675 = vmatprep.subr.mxu0 0.0
          %676 = vmatpush1.msra.mxu0 0.0
          %677 = vmatprep.subr.mxu0 0.0
          %678 = vmatpush1.msra.mxu0 0.0
          %679 = vmatprep.subr.mxu0 0.0
          %680 = vmatpush1.msra.mxu0 0.0
          %681 = vmatprep.subr.mxu0 0.0
          %682 = vmatpush1.msra.mxu0 0.0
          %683 = vmatprep.subr.mxu0 0.0
          %684 = vmatpush1.msra.mxu0 0.0
          %685 = vmatprep.subr.mxu0 0.0
          %686 = vmatpush1.msra.mxu0 0.0
          %687 = vmatprep.subr.mxu0 0.0
          %688 = vmatpush1.msra.mxu0 %v659
          %689 = vmatprep.subr.mxu0 0.0
          %690 = vmatpush1.msra.mxu0 %v658
          %691 = vmatprep.subr.mxu0 0.0
          %692 = vmatpush1.msra.mxu0 %v657
          %693 = vmatprep.subr.mxu0 0.0
          %694 = vmatpush1.msra.mxu0 %v656
          %695 = vmatprep.subr.mxu0 0.0
          %696 = vmatpush2.msra.mxu0 0.0
          %697 = vmatprep.subr.mxu0 0.0
          %698 = vmatpush2.msra.mxu0 0.0
          %699 = vmatprep.subr.mxu0 0.0
          %700 = vmatpush2.msra.mxu0 0.0
          %701 = vmatprep.subr.mxu0 0.0
          %702 = vmatpush2.msra.mxu0 0.0
          %703 = vmatprep.subr.mxu0 0.0
          %704 = vmatpush2.msra.mxu0 0.0
          %705 = vmatprep.subr.mxu0 0.0
          %706 = vmatpush2.msra.mxu0 0.0
          %707 = vmatprep.subr.mxu0 0.0
          %708 = vmatpush2.msra.mxu0 0.0
          %709 = vmatprep.subr.mxu0 0.0
          %710 = vmatpush2.msra.mxu0 0.0
          %711 = vmatprep.subr.mxu0 0.0
          %712 = vmatpush2.msra.mxu0 0.0
          %713 = vmatprep.subr.mxu0 0.0
          %714 = vmatpush2.msra.mxu0 0.0
          %715 = vmatprep.subr.mxu0 0.0
          %716 = vmatpush2.msra.mxu0 0.0
          %717 = vmatprep.subr.mxu0 0.0
          %718 = vmatpush2.msra.mxu0 0.0
          %719 = vmatprep.subr.mxu0 0.0
          %720 = vmatpush2.msra.mxu0 0.0
          %721 = vmatprep.subr.mxu0 0.0
          %722 = vmatpush2.msra.mxu0 0.0
          %723 = vmatprep.subr.mxu0 0.0
          %724 = vmatpush2.msra.mxu0 0.0
          %725 = vmatprep.subr.mxu0 0.0
          %726 = vmatpush2.msra.mxu0 0.0
          %727 = vmatprep.mubr.f32.mxu0 0.0
          %728 = vmatmul.mubr.f32.gmra.mxu0 %v661
          %v729 = vpop.f32.mrf.mxu0
          %v730 = vadd.f32 0.0, %v729
          %v731 = vpop.f32.mrf.mxu0
          %732 = vdwg.mxu0
          %733 = vst.msk [vmem:[#allocation3] sm:$0xff] %vm581, %v730
        $region92: #{tpu_custom_call.1} parent=75 // pred_fallthru
          _
        %v734 = vld [vmem:[%s8] sm:$0x1]
        %v735 = vld [vmem:[%s9] sm:$0x1]
        %v736 = vld [vmem:[%s7] sm:$0x1]
        %v737 = vld [vmem:[%s13] sm:$0x1]
        %v738 = vld [vmem:[%s507] sm:$0xff]
        %v739 = vld [vmem:[%s3] sm:$0xff]
        %v740 = vld [vmem:[%s3 + $0x8] sm:$0xff]
        %v741 = vld [vmem:[%s3 + $0x10] sm:$0xff]
        %v742 = vld [vmem:[%s3 + $0x18] sm:$0xff]
        %vm743 = vcmask 261120
        %v745 = vsel %vm743, %v738, 0
        %747 = vmatprep.subr.mxu0 0.0
        %748 = vmatpush1.msra.mxu0 0.0
        %749 = vmatprep.subr.mxu0 0.0
        %750 = vmatpush1.msra.mxu0 0.0
        %751 = vmatprep.subr.mxu0 0.0
        %752 = vmatpush1.msra.mxu0 0.0
        %753 = vmatprep.subr.mxu0 0.0
        %754 = vmatpush1.msra.mxu0 0.0
        %755 = vmatprep.subr.mxu0 0.0
        %756 = vmatpush1.msra.mxu0 0.0
        %757 = vmatprep.subr.mxu0 0.0
        %758 = vmatpush1.msra.mxu0 0.0
        %759 = vmatprep.subr.mxu0 0.0
        %760 = vmatpush1.msra.mxu0 0.0
        %761 = vmatprep.subr.mxu0 0.0
        %762 = vmatpush1.msra.mxu0 0.0
        %763 = vmatprep.subr.mxu0 0.0
        %764 = vmatpush1.msra.mxu0 0.0
        %765 = vmatprep.subr.mxu0 0.0
        %766 = vmatpush1.msra.mxu0 0.0
        %767 = vmatprep.subr.mxu0 0.0
        %768 = vmatpush1.msra.mxu0 0.0
        %769 = vmatprep.subr.mxu0 0.0
        %770 = vmatpush1.msra.mxu0 0.0
        %771 = vmatprep.subr.mxu0 0.0
        %772 = vmatpush1.msra.mxu0 %v742
        %773 = vmatprep.subr.mxu0 0.0
        %774 = vmatpush1.msra.mxu0 %v741
        %775 = vmatprep.subr.mxu0 0.0
        %776 = vmatpush1.msra.mxu0 %v740
        %777 = vmatprep.subr.mxu0 0.0
        %778 = vmatpush1.msra.mxu0 %v739
        %779 = vmatprep.subr.mxu0 0.0
        %780 = vmatpush2.msra.mxu0 0.0
        %781 = vmatprep.subr.mxu0 0.0
        %782 = vmatpush2.msra.mxu0 0.0
        %783 = vmatprep.subr.mxu0 0.0
        %784 = vmatpush2.msra.mxu0 0.0
        %785 = vmatprep.subr.mxu0 0.0
        %786 = vmatpush2.msra.mxu0 0.0
        %787 = vmatprep.subr.mxu0 0.0
        %788 = vmatpush2.msra.mxu0 0.0
        %789 = vmatprep.subr.mxu0 0.0
        %790 = vmatpush2.msra.mxu0 0.0
        %791 = vmatprep.subr.mxu0 0.0
        %792 = vmatpush2.msra.mxu0 0.0
        %793 = vmatprep.subr.mxu0 0.0
        %794 = vmatpush2.msra.mxu0 0.0
        %795 = vmatprep.subr.mxu0 0.0
        %796 = vmatpush2.msra.mxu0 0.0
        %797 = vmatprep.subr.mxu0 0.0
        %798 = vmatpush2.msra.mxu0 0.0
        %799 = vmatprep.subr.mxu0 0.0
        %800 = vmatpush2.msra.mxu0 0.0
        %801 = vmatprep.subr.mxu0 0.0
        %802 = vmatpush2.msra.mxu0 0.0
        %803 = vmatprep.subr.mxu0 0.0
        %804 = vmatpush2.msra.mxu0 0.0
        %805 = vmatprep.subr.mxu0 0.0
        %806 = vmatpush2.msra.mxu0 0.0
        %807 = vmatprep.subr.mxu0 0.0
        %808 = vmatpush2.msra.mxu0 0.0
        %809 = vmatprep.subr.mxu0 0.0
        %810 = vmatpush2.msra.mxu0 0.0
        %811 = vmatprep.mubr.f32.mxu0 0.0
        %812 = vmatmul.mubr.f32.gmra.mxu0 %v745
        %v813 = vpop.f32.mrf.mxu0
        %v814 = vadd.f32 0.0, %v813
        %v815 = vpop.f32.mrf.mxu0
        %816 = vdwg.mxu0
        %v817 = vld [vmem:[#allocation2] sm:$0xff]
        %v818 = vld [vmem:[#allocation3] sm:$0xff]
        %vm819 = vcmask 64512
        %v821 = vsel %vm819, %v814, 0
        %v824 = vsel %vm819, %v817, 0
        %826 = vmatprep.subr.mxu0 0.0
        %827 = vmatpush1.xpose.msra.mxu0 0.0
        %828 = vmatprep.subr.mxu0 0.0
        %829 = vmatpush1.xpose.msra.mxu0 0.0
        %830 = vmatprep.subr.mxu0 0.0
        %831 = vmatpush1.xpose.msra.mxu0 0.0
        %832 = vmatprep.subr.mxu0 0.0
        %833 = vmatpush1.xpose.msra.mxu0 0.0
        %834 = vmatprep.subr.mxu0 0.0
        %835 = vmatpush1.xpose.msra.mxu0 0.0
        %836 = vmatprep.subr.mxu0 0.0
        %837 = vmatpush1.xpose.msra.mxu0 0.0
        %838 = vmatprep.subr.mxu0 0.0
        %839 = vmatpush1.xpose.msra.mxu0 0.0
        %840 = vmatprep.subr.mxu0 0.0
        %841 = vmatpush1.xpose.msra.mxu0 0.0
        %842 = vmatprep.subr.mxu0 0.0
        %843 = vmatpush1.xpose.msra.mxu0 0.0
        %844 = vmatprep.subr.mxu0 0.0
        %845 = vmatpush1.xpose.msra.mxu0 0.0
        %846 = vmatprep.subr.mxu0 0.0
        %847 = vmatpush1.xpose.msra.mxu0 0.0
        %848 = vmatprep.subr.mxu0 0.0
        %849 = vmatpush1.xpose.msra.mxu0 0.0
        %850 = vmatprep.subr.mxu0 0.0
        %851 = vmatpush1.xpose.msra.mxu0 0.0
        %852 = vmatprep.subr.mxu0 0.0
        %853 = vmatpush1.xpose.msra.mxu0 0.0
        %854 = vmatprep.subr.mxu0 0.0
        %855 = vmatpush1.xpose.msra.mxu0 0.0
        %856 = vmatprep.subr.mxu0 0.0
        %857 = vmatpush1.xpose.msra.mxu0 %v824
        %858 = vmatprep.subr.mxu0 0.0
        %859 = vmatpush2.xpose.msra.mxu0 0.0
        %860 = vmatprep.subr.mxu0 0.0
        %861 = vmatpush2.xpose.msra.mxu0 0.0
        %862 = vmatprep.subr.mxu0 0.0
        %863 = vmatpush2.xpose.msra.mxu0 0.0
        %864 = vmatprep.subr.mxu0 0.0
        %865 = vmatpush2.xpose.msra.mxu0 0.0
        %866 = vmatprep.subr.mxu0 0.0
        %867 = vmatpush2.xpose.msra.mxu0 0.0
        %868 = vmatprep.subr.mxu0 0.0
        %869 = vmatpush2.xpose.msra.mxu0 0.0
        %870 = vmatprep.subr.mxu0 0.0
        %871 = vmatpush2.xpose.msra.mxu0 0.0
        %872 = vmatprep.subr.mxu0 0.0
        %873 = vmatpush2.xpose.msra.mxu0 0.0
        %874 = vmatprep.subr.mxu0 0.0
        %875 = vmatpush2.xpose.msra.mxu0 0.0
        %876 = vmatprep.subr.mxu0 0.0
        %877 = vmatpush2.xpose.msra.mxu0 0.0
        %878 = vmatprep.subr.mxu0 0.0
        %879 = vmatpush2.xpose.msra.mxu0 0.0
        %880 = vmatprep.subr.mxu0 0.0
        %881 = vmatpush2.xpose.msra.mxu0 0.0
        %882 = vmatprep.subr.mxu0 0.0
        %883 = vmatpush2.xpose.msra.mxu0 0.0
        %884 = vmatprep.subr.mxu0 0.0
        %885 = vmatpush2.xpose.msra.mxu0 0.0
        %886 = vmatprep.subr.mxu0 0.0
        %887 = vmatpush2.xpose.msra.mxu0 0.0
        %888 = vmatprep.subr.mxu0 0.0
        %889 = vmatpush2.xpose.msra.mxu0 0.0
        %890 = vmatprep.mubr.f32.mxu0 0.0
        %891 = vmatmul.mubr.f32.gmra.mxu0 %v821
        %v892 = vpop.f32.mrf.mxu0
        %v893 = vadd.f32 0.0, %v892
        %v894 = vpop.f32.mrf.mxu0
        %895 = vdwg.mxu0
        %v896 = vmul.f32 %v893, 0.35355338
        %v897 = vsel %vm819, %v896, -inf
        %898 = vmax.xlane.f32.xlu0 %v897
        %v899 = vpop.xlane.xlu0 %898
        %v900 = vsub.f32 %v896, %v899
        %v901 = vmul.f32 %v900, 1.442695
        %v902 = vpow.pop %v901
        %v903 = vsel %vm819, %v902, 0.0
        %904 = vadd.xlane.f32.xlu0 %v903
        %v905 = vpop.xlane.xlu0 %904
        %v906 = vrcp.pop %v905
        %v907 = vmul.f32 %v902, %v906
        %v909 = vsel %vm819, %v907, 0
        %911 = vmatprep.subr.mxu0 0.0
        %912 = vmatpush1.msra.mxu0 0.0
        %913 = vmatprep.subr.mxu0 0.0
        %914 = vmatpush1.msra.mxu0 0.0
        %915 = vmatprep.subr.mxu0 0.0
        %916 = vmatpush1.msra.mxu0 0.0
        %917 = vmatprep.subr.mxu0 0.0
        %918 = vmatpush1.msra.mxu0 0.0
        %919 = vmatprep.subr.mxu0 0.0
        %920 = vmatpush1.msra.mxu0 0.0
        %921 = vmatprep.subr.mxu0 0.0
        %922 = vmatpush1.msra.mxu0 0.0
        %923 = vmatprep.subr.mxu0 0.0
        %924 = vmatpush1.msra.mxu0 0.0
        %925 = vmatprep.subr.mxu0 0.0
        %926 = vmatpush1.msra.mxu0 0.0
        %927 = vmatprep.subr.mxu0 0.0
        %928 = vmatpush1.msra.mxu0 0.0
        %929 = vmatprep.subr.mxu0 0.0
        %930 = vmatpush1.msra.mxu0 0.0
        %931 = vmatprep.subr.mxu0 0.0
        %932 = vmatpush1.msra.mxu0 0.0
        %933 = vmatprep.subr.mxu0 0.0
        %934 = vmatpush1.msra.mxu0 0.0
        %935 = vmatprep.subr.mxu0 0.0
        %936 = vmatpush1.msra.mxu0 0.0
        %937 = vmatprep.subr.mxu0 0.0
        %938 = vmatpush1.msra.mxu0 0.0
        %939 = vmatprep.subr.mxu0 0.0
        %940 = vmatpush1.msra.mxu0 0.0
        %941 = vmatprep.subr.mxu0 0.0
        %942 = vmatpush1.msra.mxu0 %v818
        %943 = vmatprep.subr.mxu0 0.0
        %944 = vmatpush2.msra.mxu0 0.0
        %945 = vmatprep.subr.mxu0 0.0
        %946 = vmatpush2.msra.mxu0 0.0
        %947 = vmatprep.subr.mxu0 0.0
        %948 = vmatpush2.msra.mxu0 0.0
        %949 = vmatprep.subr.mxu0 0.0
        %950 = vmatpush2.msra.mxu0 0.0
        %951 = vmatprep.subr.mxu0 0.0
        %952 = vmatpush2.msra.mxu0 0.0
        %953 = vmatprep.subr.mxu0 0.0
        %954 = vmatpush2.msra.mxu0 0.0
        %955 = vmatprep.subr.mxu0 0.0
        %956 = vmatpush2.msra.mxu0 0.0
        %957 = vmatprep.subr.mxu0 0.0
        %958 = vmatpush2.msra.mxu0 0.0
        %959 = vmatprep.subr.mxu0 0.0
        %960 = vmatpush2.msra.mxu0 0.0
        %961 = vmatprep.subr.mxu0 0.0
        %962 = vmatpush2.msra.mxu0 0.0
        %963 = vmatprep.subr.mxu0 0.0
        %964 = vmatpush2.msra.mxu0 0.0
        %965 = vmatprep.subr.mxu0 0.0
        %966 = vmatpush2.msra.mxu0 0.0
        %967 = vmatprep.subr.mxu0 0.0
        %968 = vmatpush2.msra.mxu0 0.0
        %969 = vmatprep.subr.mxu0 0.0
        %970 = vmatpush2.msra.mxu0 0.0
        %971 = vmatprep.subr.mxu0 0.0
        %972 = vmatpush2.msra.mxu0 0.0
        %973 = vmatprep.subr.mxu0 0.0
        %974 = vmatpush2.msra.mxu0 0.0
        %975 = vmatprep.mubr.f32.mxu0 0.0
        %976 = vmatmul.mubr.f32.gmra.mxu0 %v909
        %v977 = vpop.f32.mrf.mxu0
        %v978 = vadd.f32 0.0, %v977
        %v979 = vpop.f32.mrf.mxu0
        %980 = vdwg.mxu0
        %981 = vrot.lane.b32.xlu0 %v814, 120
        %v982 = vpop.permute.xlu0 %981
        %983 = vrot.lane.b32.xlu0 %v817, 120
        %v984 = vpop.permute.xlu0 %983
        %v985 = vsel %vm819, %v982, 0
        %v987 = vsel %vm819, %v984, 0
        %989 = vmatprep.subr.mxu0 0.0
        %990 = vmatpush1.xpose.msra.mxu0 0.0
        %991 = vmatprep.subr.mxu0 0.0
        %992 = vmatpush1.xpose.msra.mxu0 0.0
        %993 = vmatprep.subr.mxu0 0.0
        %994 = vmatpush1.xpose.msra.mxu0 0.0
        %995 = vmatprep.subr.mxu0 0.0
        %996 = vmatpush1.xpose.msra.mxu0 0.0
        %997 = vmatprep.subr.mxu0 0.0
        %998 = vmatpush1.xpose.msra.mxu0 0.0
        %999 = vmatprep.subr.mxu0 0.0
        %1000 = vmatpush1.xpose.msra.mxu0 0.0
        %1001 = vmatprep.subr.mxu0 0.0
        %1002 = vmatpush1.xpose.msra.mxu0 0.0
        %1003 = vmatprep.subr.mxu0 0.0
        %1004 = vmatpush1.xpose.msra.mxu0 0.0
        %1005 = vmatprep.subr.mxu0 0.0
        %1006 = vmatpush1.xpose.msra.mxu0 0.0
        %1007 = vmatprep.subr.mxu0 0.0
        %1008 = vmatpush1.xpose.msra.mxu0 0.0
        %1009 = vmatprep.subr.mxu0 0.0
        %1010 = vmatpush1.xpose.msra.mxu0 0.0
        %1011 = vmatprep.subr.mxu0 0.0
        %1012 = vmatpush1.xpose.msra.mxu0 0.0
        %1013 = vmatprep.subr.mxu0 0.0
        %1014 = vmatpush1.xpose.msra.mxu0 0.0
        %1015 = vmatprep.subr.mxu0 0.0
        %1016 = vmatpush1.xpose.msra.mxu0 0.0
        %1017 = vmatprep.subr.mxu0 0.0
        %1018 = vmatpush1.xpose.msra.mxu0 0.0
        %1019 = vmatprep.subr.mxu0 0.0
        %1020 = vmatpush1.xpose.msra.mxu0 %v987
        %1021 = vmatprep.subr.mxu0 0.0
        %1022 = vmatpush2.xpose.msra.mxu0 0.0
        %1023 = vmatprep.subr.mxu0 0.0
        %1024 = vmatpush2.xpose.msra.mxu0 0.0
        %1025 = vmatprep.subr.mxu0 0.0
        %1026 = vmatpush2.xpose.msra.mxu0 0.0
        %1027 = vmatprep.subr.mxu0 0.0
        %1028 = vmatpush2.xpose.msra.mxu0 0.0
        %1029 = vmatprep.subr.mxu0 0.0
        %1030 = vmatpush2.xpose.msra.mxu0 0.0
        %1031 = vmatprep.subr.mxu0 0.0
        %1032 = vmatpush2.xpose.msra.mxu0 0.0
        %1033 = vmatprep.subr.mxu0 0.0
        %1034 = vmatpush2.xpose.msra.mxu0 0.0
        %1035 = vmatprep.subr.mxu0 0.0
        %1036 = vmatpush2.xpose.msra.mxu0 0.0
        %1037 = vmatprep.subr.mxu0 0.0
        %1038 = vmatpush2.xpose.msra.mxu0 0.0
        %1039 = vmatprep.subr.mxu0 0.0
        %1040 = vmatpush2.xpose.msra.mxu0 0.0
        %1041 = vmatprep.subr.mxu0 0.0
        %1042 = vmatpush2.xpose.msra.mxu0 0.0
        %1043 = vmatprep.subr.mxu0 0.0
        %1044 = vmatpush2.xpose.msra.mxu0 0.0
        %1045 = vmatprep.subr.mxu0 0.0
        %1046 = vmatpush2.xpose.msra.mxu0 0.0
        %1047 = vmatprep.subr.mxu0 0.0
        %1048 = vmatpush2.xpose.msra.mxu0 0.0
        %1049 = vmatprep.subr.mxu0 0.0
        %1050 = vmatpush2.xpose.msra.mxu0 0.0
        %1051 = vmatprep.subr.mxu0 0.0
        %1052 = vmatpush2.xpose.msra.mxu0 0.0
        %1053 = vmatprep.mubr.f32.mxu0 0.0
        %1054 = vmatmul.mubr.f32.gmra.mxu0 %v985
        %v1055 = vpop.f32.mrf.mxu0
        %v1056 = vadd.f32 0.0, %v1055
        %v1057 = vpop.f32.mrf.mxu0
        %1058 = vdwg.mxu0
        %v1059 = vmul.f32 %v1056, 0.35355338
        %v1060 = vsel %vm819, %v1059, -inf
        %1061 = vmax.xlane.f32.xlu0 %v1060
        %v1062 = vpop.xlane.xlu0 %1061
        %v1063 = vsub.f32 %v1059, %v1062
        %v1064 = vmul.f32 %v1063, 1.442695
        %v1065 = vpow.pop %v1064
        %v1066 = vsel %vm819, %v1065, 0.0
        %1067 = vadd.xlane.f32.xlu0 %v1066
        %v1068 = vpop.xlane.xlu0 %1067
        %v1069 = vrcp.pop %v1068
        %v1070 = vmul.f32 %v1065, %v1069
        %1072 = vrot.lane.b32.xlu0 %v818, 120
        %v1073 = vpop.permute.xlu0 %1072
        %v1076 = vsel %vm819, %v1070, 0
        %1078 = vmatprep.subr.mxu0 0.0
        %1079 = vmatpush1.msra.mxu0 0.0
        %1080 = vmatprep.subr.mxu0 0.0
        %1081 = vmatpush1.msra.mxu0 0.0
        %1082 = vmatprep.subr.mxu0 0.0
        %1083 = vmatpush1.msra.mxu0 0.0
        %1084 = vmatprep.subr.mxu0 0.0
        %1085 = vmatpush1.msra.mxu0 0.0
        %1086 = vmatprep.subr.mxu0 0.0
        %1087 = vmatpush1.msra.mxu0 0.0
        %1088 = vmatprep.subr.mxu0 0.0
        %1089 = vmatpush1.msra.mxu0 0.0
        %1090 = vmatprep.subr.mxu0 0.0
        %1091 = vmatpush1.msra.mxu0 0.0
        %1092 = vmatprep.subr.mxu0 0.0
        %1093 = vmatpush1.msra.mxu0 0.0
        %1094 = vmatprep.subr.mxu0 0.0
        %1095 = vmatpush1.msra.mxu0 0.0
        %1096 = vmatprep.subr.mxu0 0.0
        %1097 = vmatpush1.msra.mxu0 0.0
        %1098 = vmatprep.subr.mxu0 0.0
        %1099 = vmatpush1.msra.mxu0 0.0
        %1100 = vmatprep.subr.mxu0 0.0
        %1101 = vmatpush1.msra.mxu0 0.0
        %1102 = vmatprep.subr.mxu0 0.0
        %1103 = vmatpush1.msra.mxu0 0.0
        %1104 = vmatprep.subr.mxu0 0.0
        %1105 = vmatpush1.msra.mxu0 0.0
        %1106 = vmatprep.subr.mxu0 0.0
        %1107 = vmatpush1.msra.mxu0 0.0
        %1108 = vmatprep.subr.mxu0 0.0
        %1109 = vmatpush1.msra.mxu0 %v1073
        %1110 = vmatprep.subr.mxu0 0.0
        %1111 = vmatpush2.msra.mxu0 0.0
        %1112 = vmatprep.subr.mxu0 0.0
        %1113 = vmatpush2.msra.mxu0 0.0
        %1114 = vmatprep.subr.mxu0 0.0
        %1115 = vmatpush2.msra.mxu0 0.0
        %1116 = vmatprep.subr.mxu0 0.0
        %1117 = vmatpush2.msra.mxu0 0.0
        %1118 = vmatprep.subr.mxu0 0.0
        %1119 = vmatpush2.msra.mxu0 0.0
        %1120 = vmatprep.subr.mxu0 0.0
        %1121 = vmatpush2.msra.mxu0 0.0
        %1122 = vmatprep.subr.mxu0 0.0
        %1123 = vmatpush2.msra.mxu0 0.0
        %1124 = vmatprep.subr.mxu0 0.0
        %1125 = vmatpush2.msra.mxu0 0.0
        %1126 = vmatprep.subr.mxu0 0.0
        %1127 = vmatpush2.msra.mxu0 0.0
        %1128 = vmatprep.subr.mxu0 0.0
        %1129 = vmatpush2.msra.mxu0 0.0
        %1130 = vmatprep.subr.mxu0 0.0
        %1131 = vmatpush2.msra.mxu0 0.0
        %1132 = vmatprep.subr.mxu0 0.0
        %1133 = vmatpush2.msra.mxu0 0.0
        %1134 = vmatprep.subr.mxu0 0.0
        %1135 = vmatpush2.msra.mxu0 0.0
        %1136 = vmatprep.subr.mxu0 0.0
        %1137 = vmatpush2.msra.mxu0 0.0
        %1138 = vmatprep.subr.mxu0 0.0
        %1139 = vmatpush2.msra.mxu0 0.0
        %1140 = vmatprep.subr.mxu0 0.0
        %1141 = vmatpush2.msra.mxu0 0.0
        %1142 = vmatprep.mubr.f32.mxu0 0.0
        %1143 = vmatmul.mubr.f32.gmra.mxu0 %v1076
        %v1144 = vpop.f32.mrf.mxu0
        %v1145 = vadd.f32 0.0, %v1144
        %v1146 = vpop.f32.mrf.mxu0
        %1147 = vdwg.mxu0
        %1148 = vrot.lane.b32.xlu0 %v814, 112
        %v1149 = vpop.permute.xlu0 %1148
        %1150 = vrot.lane.b32.xlu0 %v817, 112
        %v1151 = vpop.permute.xlu0 %1150
        %v1152 = vsel %vm819, %v1149, 0
        %v1154 = vsel %vm819, %v1151, 0
        %1156 = vmatprep.subr.mxu0 0.0
        %1157 = vmatpush1.xpose.msra.mxu0 0.0
        %1158 = vmatprep.subr.mxu0 0.0
        %1159 = vmatpush1.xpose.msra.mxu0 0.0
        %1160 = vmatprep.subr.mxu0 0.0
        %1161 = vmatpush1.xpose.msra.mxu0 0.0
        %1162 = vmatprep.subr.mxu0 0.0
        %1163 = vmatpush1.xpose.msra.mxu0 0.0
        %1164 = vmatprep.subr.mxu0 0.0
        %1165 = vmatpush1.xpose.msra.mxu0 0.0
        %1166 = vmatprep.subr.mxu0 0.0
        %1167 = vmatpush1.xpose.msra.mxu0 0.0
        %1168 = vmatprep.subr.mxu0 0.0
        %1169 = vmatpush1.xpose.msra.mxu0 0.0
        %1170 = vmatprep.subr.mxu0 0.0
        %1171 = vmatpush1.xpose.msra.mxu0 0.0
        %1172 = vmatprep.subr.mxu0 0.0
        %1173 = vmatpush1.xpose.msra.mxu0 0.0
        %1174 = vmatprep.subr.mxu0 0.0
        %1175 = vmatpush1.xpose.msra.mxu0 0.0
        %1176 = vmatprep.subr.mxu0 0.0
        %1177 = vmatpush1.xpose.msra.mxu0 0.0
        %1178 = vmatprep.subr.mxu0 0.0
        %1179 = vmatpush1.xpose.msra.mxu0 0.0
        %1180 = vmatprep.subr.mxu0 0.0
        %1181 = vmatpush1.xpose.msra.mxu0 0.0
        %1182 = vmatprep.subr.mxu0 0.0
        %1183 = vmatpush1.xpose.msra.mxu0 0.0
        %1184 = vmatprep.subr.mxu0 0.0
        %1185 = vmatpush1.xpose.msra.mxu0 0.0
        %1186 = vmatprep.subr.mxu0 0.0
        %1187 = vmatpush1.xpose.msra.mxu0 %v1154
        %1188 = vmatprep.subr.mxu0 0.0
        %1189 = vmatpush2.xpose.msra.mxu0 0.0
        %1190 = vmatprep.subr.mxu0 0.0
        %1191 = vmatpush2.xpose.msra.mxu0 0.0
        %1192 = vmatprep.subr.mxu0 0.0
        %1193 = vmatpush2.xpose.msra.mxu0 0.0
        %1194 = vmatprep.subr.mxu0 0.0
        %1195 = vmatpush2.xpose.msra.mxu0 0.0
        %1196 = vmatprep.subr.mxu0 0.0
        %1197 = vmatpush2.xpose.msra.mxu0 0.0
        %1198 = vmatprep.subr.mxu0 0.0
        %1199 = vmatpush2.xpose.msra.mxu0 0.0
        %1200 = vmatprep.subr.mxu0 0.0
        %1201 = vmatpush2.xpose.msra.mxu0 0.0
        %1202 = vmatprep.subr.mxu0 0.0
        %1203 = vmatpush2.xpose.msra.mxu0 0.0
        %1204 = vmatprep.subr.mxu0 0.0
        %1205 = vmatpush2.xpose.msra.mxu0 0.0
        %1206 = vmatprep.subr.mxu0 0.0
        %1207 = vmatpush2.xpose.msra.mxu0 0.0
        %1208 = vmatprep.subr.mxu0 0.0
        %1209 = vmatpush2.xpose.msra.mxu0 0.0
        %1210 = vmatprep.subr.mxu0 0.0
        %1211 = vmatpush2.xpose.msra.mxu0 0.0
        %1212 = vmatprep.subr.mxu0 0.0
        %1213 = vmatpush2.xpose.msra.mxu0 0.0
        %1214 = vmatprep.subr.mxu0 0.0
        %1215 = vmatpush2.xpose.msra.mxu0 0.0
        %1216 = vmatprep.subr.mxu0 0.0
        %1217 = vmatpush2.xpose.msra.mxu0 0.0
        %1218 = vmatprep.subr.mxu0 0.0
        %1219 = vmatpush2.xpose.msra.mxu0 0.0
        %1220 = vmatprep.mubr.f32.mxu0 0.0
        %1221 = vmatmul.mubr.f32.gmra.mxu0 %v1152
        %v1222 = vpop.f32.mrf.mxu0
        %v1223 = vadd.f32 0.0, %v1222
        %v1224 = vpop.f32.mrf.mxu0
        %1225 = vdwg.mxu0
        %v1226 = vmul.f32 %v1223, 0.35355338
        %v1227 = vsel %vm819, %v1226, -inf
        %1228 = vmax.xlane.f32.xlu0 %v1227
        %v1229 = vpop.xlane.xlu0 %1228
        %v1230 = vsub.f32 %v1226, %v1229
        %v1231 = vmul.f32 %v1230, 1.442695
        %v1232 = vpow.pop %v1231
        %v1233 = vsel %vm819, %v1232, 0.0
        %1234 = vadd.xlane.f32.xlu0 %v1233
        %v1235 = vpop.xlane.xlu0 %1234
        %v1236 = vrcp.pop %v1235
        %v1237 = vmul.f32 %v1232, %v1236
        %1238 = vrot.lane.b32.xlu0 %v818, 112
        %v1239 = vpop.permute.xlu0 %1238
        %v1242 = vsel %vm819, %v1237, 0
        %1244 = vmatprep.subr.mxu0 0.0
        %1245 = vmatpush1.msra.mxu0 0.0
        %1246 = vmatprep.subr.mxu0 0.0
        %1247 = vmatpush1.msra.mxu0 0.0
        %1248 = vmatprep.subr.mxu0 0.0
        %1249 = vmatpush1.msra.mxu0 0.0
        %1250 = vmatprep.subr.mxu0 0.0
        %1251 = vmatpush1.msra.mxu0 0.0
        %1252 = vmatprep.subr.mxu0 0.0
        %1253 = vmatpush1.msra.mxu0 0.0
        %1254 = vmatprep.subr.mxu0 0.0
        %1255 = vmatpush1.msra.mxu0 0.0
        %1256 = vmatprep.subr.mxu0 0.0
        %1257 = vmatpush1.msra.mxu0 0.0
        %1258 = vmatprep.subr.mxu0 0.0
        %1259 = vmatpush1.msra.mxu0 0.0
        %1260 = vmatprep.subr.mxu0 0.0
        %1261 = vmatpush1.msra.mxu0 0.0
        %1262 = vmatprep.subr.mxu0 0.0
        %1263 = vmatpush1.msra.mxu0 0.0
        %1264 = vmatprep.subr.mxu0 0.0
        %1265 = vmatpush1.msra.mxu0 0.0
        %1266 = vmatprep.subr.mxu0 0.0
        %1267 = vmatpush1.msra.mxu0 0.0
        %1268 = vmatprep.subr.mxu0 0.0
        %1269 = vmatpush1.msra.mxu0 0.0
        %1270 = vmatprep.subr.mxu0 0.0
        %1271 = vmatpush1.msra.mxu0 0.0
        %1272 = vmatprep.subr.mxu0 0.0
        %1273 = vmatpush1.msra.mxu0 0.0
        %1274 = vmatprep.subr.mxu0 0.0
        %1275 = vmatpush1.msra.mxu0 %v1239
        %1276 = vmatprep.subr.mxu0 0.0
        %1277 = vmatpush2.msra.mxu0 0.0
        %1278 = vmatprep.subr.mxu0 0.0
        %1279 = vmatpush2.msra.mxu0 0.0
        %1280 = vmatprep.subr.mxu0 0.0
        %1281 = vmatpush2.msra.mxu0 0.0
        %1282 = vmatprep.subr.mxu0 0.0
        %1283 = vmatpush2.msra.mxu0 0.0
        %1284 = vmatprep.subr.mxu0 0.0
        %1285 = vmatpush2.msra.mxu0 0.0
        %1286 = vmatprep.subr.mxu0 0.0
        %1287 = vmatpush2.msra.mxu0 0.0
        %1288 = vmatprep.subr.mxu0 0.0
        %1289 = vmatpush2.msra.mxu0 0.0
        %1290 = vmatprep.subr.mxu0 0.0
        %1291 = vmatpush2.msra.mxu0 0.0
        %1292 = vmatprep.subr.mxu0 0.0
        %1293 = vmatpush2.msra.mxu0 0.0
        %1294 = vmatprep.subr.mxu0 0.0
        %1295 = vmatpush2.msra.mxu0 0.0
        %1296 = vmatprep.subr.mxu0 0.0
        %1297 = vmatpush2.msra.mxu0 0.0
        %1298 = vmatprep.subr.mxu0 0.0
        %1299 = vmatpush2.msra.mxu0 0.0
        %1300 = vmatprep.subr.mxu0 0.0
        %1301 = vmatpush2.msra.mxu0 0.0
        %1302 = vmatprep.subr.mxu0 0.0
        %1303 = vmatpush2.msra.mxu0 0.0
        %1304 = vmatprep.subr.mxu0 0.0
        %1305 = vmatpush2.msra.mxu0 0.0
        %1306 = vmatprep.subr.mxu0 0.0
        %1307 = vmatpush2.msra.mxu0 0.0
        %1308 = vmatprep.mubr.f32.mxu0 0.0
        %1309 = vmatmul.mubr.f32.gmra.mxu0 %v1242
        %v1310 = vpop.f32.mrf.mxu0
        %v1311 = vadd.f32 0.0, %v1310
        %v1312 = vpop.f32.mrf.mxu0
        %1313 = vdwg.mxu0
        %1314 = vrot.lane.b32.xlu0 %v814, 104
        %v1315 = vpop.permute.xlu0 %1314
        %1316 = vrot.lane.b32.xlu0 %v817, 104
        %v1317 = vpop.permute.xlu0 %1316
        %v1318 = vsel %vm819, %v1315, 0
        %v1320 = vsel %vm819, %v1317, 0
        %1322 = vmatprep.subr.mxu0 0.0
        %1323 = vmatpush1.xpose.msra.mxu0 0.0
        %1324 = vmatprep.subr.mxu0 0.0
        %1325 = vmatpush1.xpose.msra.mxu0 0.0
        %1326 = vmatprep.subr.mxu0 0.0
        %1327 = vmatpush1.xpose.msra.mxu0 0.0
        %1328 = vmatprep.subr.mxu0 0.0
        %1329 = vmatpush1.xpose.msra.mxu0 0.0
        %1330 = vmatprep.subr.mxu0 0.0
        %1331 = vmatpush1.xpose.msra.mxu0 0.0
        %1332 = vmatprep.subr.mxu0 0.0
        %1333 = vmatpush1.xpose.msra.mxu0 0.0
        %1334 = vmatprep.subr.mxu0 0.0
        %1335 = vmatpush1.xpose.msra.mxu0 0.0
        %1336 = vmatprep.subr.mxu0 0.0
        %1337 = vmatpush1.xpose.msra.mxu0 0.0
        %1338 = vmatprep.subr.mxu0 0.0
        %1339 = vmatpush1.xpose.msra.mxu0 0.0
        %1340 = vmatprep.subr.mxu0 0.0
        %1341 = vmatpush1.xpose.msra.mxu0 0.0
        %1342 = vmatprep.subr.mxu0 0.0
        %1343 = vmatpush1.xpose.msra.mxu0 0.0
        %1344 = vmatprep.subr.mxu0 0.0
        %1345 = vmatpush1.xpose.msra.mxu0 0.0
        %1346 = vmatprep.subr.mxu0 0.0
        %1347 = vmatpush1.xpose.msra.mxu0 0.0
        %1348 = vmatprep.subr.mxu0 0.0
        %1349 = vmatpush1.xpose.msra.mxu0 0.0
        %1350 = vmatprep.subr.mxu0 0.0
        %1351 = vmatpush1.xpose.msra.mxu0 0.0
        %1352 = vmatprep.subr.mxu0 0.0
        %1353 = vmatpush1.xpose.msra.mxu0 %v1320
        %1354 = vmatprep.subr.mxu0 0.0
        %1355 = vmatpush2.xpose.msra.mxu0 0.0
        %1356 = vmatprep.subr.mxu0 0.0
        %1357 = vmatpush2.xpose.msra.mxu0 0.0
        %1358 = vmatprep.subr.mxu0 0.0
        %1359 = vmatpush2.xpose.msra.mxu0 0.0
        %1360 = vmatprep.subr.mxu0 0.0
        %1361 = vmatpush2.xpose.msra.mxu0 0.0
        %1362 = vmatprep.subr.mxu0 0.0
        %1363 = vmatpush2.xpose.msra.mxu0 0.0
        %1364 = vmatprep.subr.mxu0 0.0
        %1365 = vmatpush2.xpose.msra.mxu0 0.0
        %1366 = vmatprep.subr.mxu0 0.0
        %1367 = vmatpush2.xpose.msra.mxu0 0.0
        %1368 = vmatprep.subr.mxu0 0.0
        %1369 = vmatpush2.xpose.msra.mxu0 0.0
        %1370 = vmatprep.subr.mxu0 0.0
        %1371 = vmatpush2.xpose.msra.mxu0 0.0
        %1372 = vmatprep.subr.mxu0 0.0
        %1373 = vmatpush2.xpose.msra.mxu0 0.0
        %1374 = vmatprep.subr.mxu0 0.0
        %1375 = vmatpush2.xpose.msra.mxu0 0.0
        %1376 = vmatprep.subr.mxu0 0.0
        %1377 = vmatpush2.xpose.msra.mxu0 0.0
        %1378 = vmatprep.subr.mxu0 0.0
        %1379 = vmatpush2.xpose.msra.mxu0 0.0
        %1380 = vmatprep.subr.mxu0 0.0
        %1381 = vmatpush2.xpose.msra.mxu0 0.0
        %1382 = vmatprep.subr.mxu0 0.0
        %1383 = vmatpush2.xpose.msra.mxu0 0.0
        %1384 = vmatprep.subr.mxu0 0.0
        %1385 = vmatpush2.xpose.msra.mxu0 0.0
        %1386 = vmatprep.mubr.f32.mxu0 0.0
        %1387 = vmatmul.mubr.f32.gmra.mxu0 %v1318
        %v1388 = vpop.f32.mrf.mxu0
        %v1389 = vadd.f32 0.0, %v1388
        %v1390 = vpop.f32.mrf.mxu0
        %1391 = vdwg.mxu0
        %v1392 = vmul.f32 %v1389, 0.35355338
        %v1393 = vsel %vm819, %v1392, -inf
        %1394 = vmax.xlane.f32.xlu0 %v1393
        %v1395 = vpop.xlane.xlu0 %1394
        %v1396 = vsub.f32 %v1392, %v1395
        %v1397 = vmul.f32 %v1396, 1.442695
        %v1398 = vpow.pop %v1397
        %v1399 = vsel %vm819, %v1398, 0.0
        %1400 = vadd.xlane.f32.xlu0 %v1399
        %v1401 = vpop.xlane.xlu0 %1400
        %v1402 = vrcp.pop %v1401
        %v1403 = vmul.f32 %v1398, %v1402
        %1404 = vrot.lane.b32.xlu0 %v818, 104
        %v1405 = vpop.permute.xlu0 %1404
        %v1408 = vsel %vm819, %v1403, 0
        %1410 = vmatprep.subr.mxu0 0.0
        %1411 = vmatpush1.msra.mxu0 0.0
        %1412 = vmatprep.subr.mxu0 0.0
        %1413 = vmatpush1.msra.mxu0 0.0
        %1414 = vmatprep.subr.mxu0 0.0
        %1415 = vmatpush1.msra.mxu0 0.0
        %1416 = vmatprep.subr.mxu0 0.0
        %1417 = vmatpush1.msra.mxu0 0.0
        %1418 = vmatprep.subr.mxu0 0.0
        %1419 = vmatpush1.msra.mxu0 0.0
        %1420 = vmatprep.subr.mxu0 0.0
        %1421 = vmatpush1.msra.mxu0 0.0
        %1422 = vmatprep.subr.mxu0 0.0
        %1423 = vmatpush1.msra.mxu0 0.0
        %1424 = vmatprep.subr.mxu0 0.0
        %1425 = vmatpush1.msra.mxu0 0.0
        %1426 = vmatprep.subr.mxu0 0.0
        %1427 = vmatpush1.msra.mxu0 0.0
        %1428 = vmatprep.subr.mxu0 0.0
        %1429 = vmatpush1.msra.mxu0 0.0
        %1430 = vmatprep.subr.mxu0 0.0
        %1431 = vmatpush1.msra.mxu0 0.0
        %1432 = vmatprep.subr.mxu0 0.0
        %1433 = vmatpush1.msra.mxu0 0.0
        %1434 = vmatprep.subr.mxu0 0.0
        %1435 = vmatpush1.msra.mxu0 0.0
        %1436 = vmatprep.subr.mxu0 0.0
        %1437 = vmatpush1.msra.mxu0 0.0
        %1438 = vmatprep.subr.mxu0 0.0
        %1439 = vmatpush1.msra.mxu0 0.0
        %1440 = vmatprep.subr.mxu0 0.0
        %1441 = vmatpush1.msra.mxu0 %v1405
        %1442 = vmatprep.subr.mxu0 0.0
        %1443 = vmatpush2.msra.mxu0 0.0
        %1444 = vmatprep.subr.mxu0 0.0
        %1445 = vmatpush2.msra.mxu0 0.0
        %1446 = vmatprep.subr.mxu0 0.0
        %1447 = vmatpush2.msra.mxu0 0.0
        %1448 = vmatprep.subr.mxu0 0.0
        %1449 = vmatpush2.msra.mxu0 0.0
        %1450 = vmatprep.subr.mxu0 0.0
        %1451 = vmatpush2.msra.mxu0 0.0
        %1452 = vmatprep.subr.mxu0 0.0
        %1453 = vmatpush2.msra.mxu0 0.0
        %1454 = vmatprep.subr.mxu0 0.0
        %1455 = vmatpush2.msra.mxu0 0.0
        %1456 = vmatprep.subr.mxu0 0.0
        %1457 = vmatpush2.msra.mxu0 0.0
        %1458 = vmatprep.subr.mxu0 0.0
        %1459 = vmatpush2.msra.mxu0 0.0
        %1460 = vmatprep.subr.mxu0 0.0
        %1461 = vmatpush2.msra.mxu0 0.0
        %1462 = vmatprep.subr.mxu0 0.0
        %1463 = vmatpush2.msra.mxu0 0.0
        %1464 = vmatprep.subr.mxu0 0.0
        %1465 = vmatpush2.msra.mxu0 0.0
        %1466 = vmatprep.subr.mxu0 0.0
        %1467 = vmatpush2.msra.mxu0 0.0
        %1468 = vmatprep.subr.mxu0 0.0
        %1469 = vmatpush2.msra.mxu0 0.0
        %1470 = vmatprep.subr.mxu0 0.0
        %1471 = vmatpush2.msra.mxu0 0.0
        %1472 = vmatprep.subr.mxu0 0.0
        %1473 = vmatpush2.msra.mxu0 0.0
        %1474 = vmatprep.mubr.f32.mxu0 0.0
        %1475 = vmatmul.mubr.f32.gmra.mxu0 %v1408
        %v1476 = vpop.f32.mrf.mxu0
        %v1477 = vadd.f32 0.0, %v1476
        %v1478 = vpop.f32.mrf.mxu0
        %1479 = vdwg.mxu0
        %1481 = vrot.lane.b32.xlu0 %v1145, 8
        %v1482 = vpop.permute.xlu0 %1481
        %1485 = vrot.lane.b32.xlu0 %v1311, 16
        %v1486 = vpop.permute.xlu0 %1485
        %1489 = vrot.lane.b32.xlu0 %v1477, 24
        %v1490 = vpop.permute.xlu0 %1489
        %v1492 = vsel %vm819, %v978, %v1482
        %vm1493 = vcmask 130048
        %v1494 = vsel %vm1493, %v1492, %v1486
        %vm1495 = vcmask 195584
        %v1496 = vsel %vm1495, %v1494, %v1490
        %v1497 = vld [vmem:[%s6] sm:$0xff]
        %v1498 = vld [vmem:[%s6 + $0x8] sm:$0xff]
        %v1499 = vld [vmem:[%s6 + $0x10] sm:$0xff]
        %v1500 = vld [vmem:[%s6 + $0x18] sm:$0xff]
        %v1502 = vlaneseq
        %v1503 = vshrl.u32 %v1502, 7
        %v1504 = vsub.s32 0, %v1503
        %v1505 = vrot.slane %v736, %v1504
        %v1508 = vsel %vm743, %v1496, 0
        %1510 = vmatprep.subr.mxu0 0.0
        %1511 = vmatpush1.msra.mxu0 0.0
        %1512 = vmatprep.subr.mxu0 0.0
        %1513 = vmatpush1.msra.mxu0 0.0
        %1514 = vmatprep.subr.mxu0 0.0
        %1515 = vmatpush1.msra.mxu0 0.0
        %1516 = vmatprep.subr.mxu0 0.0
        %1517 = vmatpush1.msra.mxu0 0.0
        %1518 = vmatprep.subr.mxu0 0.0
        %1519 = vmatpush1.msra.mxu0 0.0
        %1520 = vmatprep.subr.mxu0 0.0
        %1521 = vmatpush1.msra.mxu0 0.0
        %1522 = vmatprep.subr.mxu0 0.0
        %1523 = vmatpush1.msra.mxu0 0.0
        %1524 = vmatprep.subr.mxu0 0.0
        %1525 = vmatpush1.msra.mxu0 0.0
        %1526 = vmatprep.subr.mxu0 0.0
        %1527 = vmatpush1.msra.mxu0 0.0
        %1528 = vmatprep.subr.mxu0 0.0
        %1529 = vmatpush1.msra.mxu0 0.0
        %1530 = vmatprep.subr.mxu0 0.0
        %1531 = vmatpush1.msra.mxu0 0.0
        %1532 = vmatprep.subr.mxu0 0.0
        %1533 = vmatpush1.msra.mxu0 0.0
        %1534 = vmatprep.subr.mxu0 0.0
        %1535 = vmatpush1.msra.mxu0 %v1500
        %1536 = vmatprep.subr.mxu0 0.0
        %1537 = vmatpush1.msra.mxu0 %v1499
        %1538 = vmatprep.subr.mxu0 0.0
        %1539 = vmatpush1.msra.mxu0 %v1498
        %1540 = vmatprep.subr.mxu0 0.0
        %1541 = vmatpush1.msra.mxu0 %v1497
        %1542 = vmatprep.subr.mxu0 0.0
        %1543 = vmatpush2.msra.mxu0 0.0
        %1544 = vmatprep.subr.mxu0 0.0
        %1545 = vmatpush2.msra.mxu0 0.0
        %1546 = vmatprep.subr.mxu0 0.0
        %1547 = vmatpush2.msra.mxu0 0.0
        %1548 = vmatprep.subr.mxu0 0.0
        %1549 = vmatpush2.msra.mxu0 0.0
        %1550 = vmatprep.subr.mxu0 0.0
        %1551 = vmatpush2.msra.mxu0 0.0
        %1552 = vmatprep.subr.mxu0 0.0
        %1553 = vmatpush2.msra.mxu0 0.0
        %1554 = vmatprep.subr.mxu0 0.0
        %1555 = vmatpush2.msra.mxu0 0.0
        %1556 = vmatprep.subr.mxu0 0.0
        %1557 = vmatpush2.msra.mxu0 0.0
        %1558 = vmatprep.subr.mxu0 0.0
        %1559 = vmatpush2.msra.mxu0 0.0
        %1560 = vmatprep.subr.mxu0 0.0
        %1561 = vmatpush2.msra.mxu0 0.0
        %1562 = vmatprep.subr.mxu0 0.0
        %1563 = vmatpush2.msra.mxu0 0.0
        %1564 = vmatprep.subr.mxu0 0.0
        %1565 = vmatpush2.msra.mxu0 0.0
        %1566 = vmatprep.subr.mxu0 0.0
        %1567 = vmatpush2.msra.mxu0 0.0
        %1568 = vmatprep.subr.mxu0 0.0
        %1569 = vmatpush2.msra.mxu0 0.0
        %1570 = vmatprep.subr.mxu0 0.0
        %1571 = vmatpush2.msra.mxu0 0.0
        %1572 = vmatprep.subr.mxu0 0.0
        %1573 = vmatpush2.msra.mxu0 0.0
        %1574 = vmatprep.mubr.f32.mxu0 0.0
        %1575 = vmatmul.mubr.f32.gmra.mxu0 %v1508
        %v1576 = vpop.f32.mrf.mxu0
        %v1577 = vadd.f32 %v1505, %v1576
        %v1578 = vpop.f32.mrf.mxu0
        %1579 = vdwg.mxu0
        %s1580 = smul.u32 %s39, 8
        %s1581 = scalar_lea.vmem %s516, %s1580 [#allocation9]
        %v1582 = vld [vmem:[%s1581] sm:$0xff]
        %v1583 = vadd.f32 %v1577, %v1582
        %v1584 = vsel %vm743, %v1583, 0.0
        %1585 = vadd.xlane.f32.xlu0 %v1584
        %v1586 = vpop.xlane.xlu0 %1585
        %v1587 = vrcp.pop 32.0
        %v1588 = vmul.f32 %v1586, %v1587
        %v1589 = vsub.f32 %v1583, %v1588
        %v1590 = vmul.f32 %v1589, %v1589
        %v1591 = vsel %vm743, %v1590, 0.0
        %1592 = vadd.xlane.f32.xlu0 %v1591
        %v1593 = vpop.xlane.xlu0 %1592
        %v1594 = vmul.f32 %v1593, %v1587
        %v1595 = vadd.f32 %v1594, 1e-05
        %v1596 = vrsqrt.pop %v1595
        %v1597 = vmul.f32 %v1589, %v1596
        %v1599 = vlaneseq
        %v1600 = vshrl.u32 %v1599, 7
        %v1601 = vsub.s32 0, %v1600
        %v1602 = vrot.slane %v734, %v1601
        %v1604 = vmul.f32 %v1597, %v1602
        %v1606 = vlaneseq
        %v1607 = vshrl.u32 %v1606, 7
        %v1608 = vsub.s32 0, %v1607
        %v1609 = vrot.slane %v735, %v1608
        %v1611 = vadd.f32 %v1604, %v1609
        %v1612 = vld [vmem:[%s11] sm:$0x1]
        %v1613 = vld [vmem:[%s10] sm:$0xff]
        %v1614 = vld [vmem:[%s10 + $0x8] sm:$0xff]
        %v1615 = vld [vmem:[%s10 + $0x10] sm:$0xff]
        %v1616 = vld [vmem:[%s10 + $0x18] sm:$0xff]
        %v1618 = vlaneseq
        %v1619 = vshrl.u32 %v1618, 7
        %v1620 = vsub.s32 0, %v1619
        %v1621 = vrot.slane %v1612, %v1620
        %v1624 = vsel %vm743, %v1611, 0
        %1626 = vmatprep.subr.mxu0 0.0
        %1627 = vmatpush1.msra.mxu0 0.0
        %1628 = vmatprep.subr.mxu0 0.0
        %1629 = vmatpush1.msra.mxu0 0.0
        %1630 = vmatprep.subr.mxu0 0.0
        %1631 = vmatpush1.msra.mxu0 0.0
        %1632 = vmatprep.subr.mxu0 0.0
        %1633 = vmatpush1.msra.mxu0 0.0
        %1634 = vmatprep.subr.mxu0 0.0
        %1635 = vmatpush1.msra.mxu0 0.0
        %1636 = vmatprep.subr.mxu0 0.0
        %1637 = vmatpush1.msra.mxu0 0.0
        %1638 = vmatprep.subr.mxu0 0.0
        %1639 = vmatpush1.msra.mxu0 0.0
        %1640 = vmatprep.subr.mxu0 0.0
        %1641 = vmatpush1.msra.mxu0 0.0
        %1642 = vmatprep.subr.mxu0 0.0
        %1643 = vmatpush1.msra.mxu0 0.0
        %1644 = vmatprep.subr.mxu0 0.0
        %1645 = vmatpush1.msra.mxu0 0.0
        %1646 = vmatprep.subr.mxu0 0.0
        %1647 = vmatpush1.msra.mxu0 0.0
        %1648 = vmatprep.subr.mxu0 0.0
        %1649 = vmatpush1.msra.mxu0 0.0
        %1650 = vmatprep.subr.mxu0 0.0
        %1651 = vmatpush1.msra.mxu0 %v1616
        %1652 = vmatprep.subr.mxu0 0.0
        %1653 = vmatpush1.msra.mxu0 %v1615
        %1654 = vmatprep.subr.mxu0 0.0
        %1655 = vmatpush1.msra.mxu0 %v1614
        %1656 = vmatprep.subr.mxu0 0.0
        %1657 = vmatpush1.msra.mxu0 %v1613
        %1658 = vmatprep.subr.mxu0 0.0
        %1659 = vmatpush2.msra.mxu0 0.0
        %1660 = vmatprep.subr.mxu0 0.0
        %1661 = vmatpush2.msra.mxu0 0.0
        %1662 = vmatprep.subr.mxu0 0.0
        %1663 = vmatpush2.msra.mxu0 0.0
        %1664 = vmatprep.subr.mxu0 0.0
        %1665 = vmatpush2.msra.mxu0 0.0
        %1666 = vmatprep.subr.mxu0 0.0
        %1667 = vmatpush2.msra.mxu0 0.0
        %1668 = vmatprep.subr.mxu0 0.0
        %1669 = vmatpush2.msra.mxu0 0.0
        %1670 = vmatprep.subr.mxu0 0.0
        %1671 = vmatpush2.msra.mxu0 0.0
        %1672 = vmatprep.subr.mxu0 0.0
        %1673 = vmatpush2.msra.mxu0 0.0
        %1674 = vmatprep.subr.mxu0 0.0
        %1675 = vmatpush2.msra.mxu0 0.0
        %1676 = vmatprep.subr.mxu0 0.0
        %1677 = vmatpush2.msra.mxu0 0.0
        %1678 = vmatprep.subr.mxu0 0.0
        %1679 = vmatpush2.msra.mxu0 0.0
        %1680 = vmatprep.subr.mxu0 0.0
        %1681 = vmatpush2.msra.mxu0 0.0
        %1682 = vmatprep.subr.mxu0 0.0
        %1683 = vmatpush2.msra.mxu0 0.0
        %1684 = vmatprep.subr.mxu0 0.0
        %1685 = vmatpush2.msra.mxu0 0.0
        %1686 = vmatprep.subr.mxu0 0.0
        %1687 = vmatpush2.msra.mxu0 0.0
        %1688 = vmatprep.subr.mxu0 0.0
        %1689 = vmatpush2.msra.mxu0 0.0
        %1690 = vmatprep.mubr.f32.mxu0 0.0
        %1691 = vmatmul.mubr.f32.gmra.mxu0 %v1624
        %v1692 = vpop.f32.mrf.mxu0
        %v1693 = vadd.f32 %v1621, %v1692
        %v1694 = vpop.f32.mrf.mxu0
        %1695 = vdwg.mxu0
        %v1696 = vmax.f32 %v1693, 0.0
        %v1697 = vld [vmem:[%s12] sm:$0xff]
        %v1698 = vld [vmem:[%s12 + $0x8] sm:$0xff]
        %v1699 = vld [vmem:[%s12 + $0x10] sm:$0xff]
        %v1700 = vld [vmem:[%s12 + $0x18] sm:$0xff]
        %v1701 = vld [vmem:[%s12 + $0x20] sm:$0xff]
        %v1702 = vld [vmem:[%s12 + $0x28] sm:$0xff]
        %v1703 = vld [vmem:[%s12 + $0x30] sm:$0xff]
        %v1704 = vld [vmem:[%s12 + $0x38] sm:$0xff]
        %v1705 = vld [vmem:[%s12 + $0x40] sm:$0xff]
        %v1706 = vld [vmem:[%s12 + $0x48] sm:$0xff]
        %v1707 = vld [vmem:[%s12 + $0x50] sm:$0xff]
        %v1708 = vld [vmem:[%s12 + $0x58] sm:$0xff]
        %v1709 = vld [vmem:[%s12 + $0x60] sm:$0xff]
        %v1710 = vld [vmem:[%s12 + $0x68] sm:$0xff]
        %v1711 = vld [vmem:[%s12 + $0x70] sm:$0xff]
        %v1712 = vld [vmem:[%s12 + $0x78] sm:$0xff]
        %v1714 = vlaneseq
        %v1715 = vshrl.u32 %v1714, 7
        %v1716 = vsub.s32 0, %v1715
        %v1717 = vrot.slane %v737, %v1716
        %1719 = vmatprep.subr.mxu0 0.0
        %1720 = vmatpush1.msra.mxu0 %v1712
        %1721 = vmatprep.subr.mxu0 0.0
        %1722 = vmatpush1.msra.mxu0 %v1711
        %1723 = vmatprep.subr.mxu0 0.0
        %1724 = vmatpush1.msra.mxu0 %v1710
        %1725 = vmatprep.subr.mxu0 0.0
        %1726 = vmatpush1.msra.mxu0 %v1709
        %1727 = vmatprep.subr.mxu0 0.0
        %1728 = vmatpush1.msra.mxu0 %v1708
        %1729 = vmatprep.subr.mxu0 0.0
        %1730 = vmatpush1.msra.mxu0 %v1707
        %1731 = vmatprep.subr.mxu0 0.0
        %1732 = vmatpush1.msra.mxu0 %v1706
        %1733 = vmatprep.subr.mxu0 0.0
        %1734 = vmatpush1.msra.mxu0 %v1705
        %1735 = vmatprep.subr.mxu0 0.0
        %1736 = vmatpush1.msra.mxu0 %v1704
        %1737 = vmatprep.subr.mxu0 0.0
        %1738 = vmatpush1.msra.mxu0 %v1703
        %1739 = vmatprep.subr.mxu0 0.0
        %1740 = vmatpush1.msra.mxu0 %v1702
        %1741 = vmatprep.subr.mxu0 0.0
        %1742 = vmatpush1.msra.mxu0 %v1701
        %1743 = vmatprep.subr.mxu0 0.0
        %1744 = vmatpush1.msra.mxu0 %v1700
        %1745 = vmatprep.subr.mxu0 0.0
        %1746 = vmatpush1.msra.mxu0 %v1699
        %1747 = vmatprep.subr.mxu0 0.0
        %1748 = vmatpush1.msra.mxu0 %v1698
        %1749 = vmatprep.subr.mxu0 0.0
        %1750 = vmatpush1.msra.mxu0 %v1697
        %1751 = vmatprep.subr.mxu0 0.0
        %1752 = vmatpush2.msra.mxu0 0.0
        %1753 = vmatprep.subr.mxu0 0.0
        %1754 = vmatpush2.msra.mxu0 0.0
        %1755 = vmatprep.subr.mxu0 0.0
        %1756 = vmatpush2.msra.mxu0 0.0
        %1757 = vmatprep.subr.mxu0 0.0
        %1758 = vmatpush2.msra.mxu0 0.0
        %1759 = vmatprep.subr.mxu0 0.0
        %1760 = vmatpush2.msra.mxu0 0.0
        %1761 = vmatprep.subr.mxu0 0.0
        %1762 = vmatpush2.msra.mxu0 0.0
        %1763 = vmatprep.subr.mxu0 0.0
        %1764 = vmatpush2.msra.mxu0 0.0
        %1765 = vmatprep.subr.mxu0 0.0
        %1766 = vmatpush2.msra.mxu0 0.0
        %1767 = vmatprep.subr.mxu0 0.0
        %1768 = vmatpush2.msra.mxu0 0.0
        %1769 = vmatprep.subr.mxu0 0.0
        %1770 = vmatpush2.msra.mxu0 0.0
        %1771 = vmatprep.subr.mxu0 0.0
        %1772 = vmatpush2.msra.mxu0 0.0
        %1773 = vmatprep.subr.mxu0 0.0
        %1774 = vmatpush2.msra.mxu0 0.0
        %1775 = vmatprep.subr.mxu0 0.0
        %1776 = vmatpush2.msra.mxu0 0.0
        %1777 = vmatprep.subr.mxu0 0.0
        %1778 = vmatpush2.msra.mxu0 0.0
        %1779 = vmatprep.subr.mxu0 0.0
        %1780 = vmatpush2.msra.mxu0 0.0
        %1781 = vmatprep.subr.mxu0 0.0
        %1782 = vmatpush2.msra.mxu0 0.0
        %1783 = vmatprep.mubr.f32.mxu0 0.0
        %1784 = vmatmul.mubr.f32.gmra.mxu0 %v1696
        %v1785 = vpop.f32.mrf.mxu0
        %v1786 = vadd.f32 %v1717, %v1785
        %v1787 = vpop.f32.mrf.mxu0
        %1788 = vdwg.mxu0
        %v1789 = vadd.f32 %v1786, %v1611
        %v1790 = vsel %vm743, %v1789, 0.0
        %1791 = vadd.xlane.f32.xlu0 %v1790
        %v1792 = vpop.xlane.xlu0 %1791
        %v1793 = vmul.f32 %v1792, %v1587
        %v1794 = vsub.f32 %v1789, %v1793
        %v1795 = vmul.f32 %v1794, %v1794
        %v1796 = vsel %vm743, %v1795, 0.0
        %1797 = vadd.xlane.f32.xlu0 %v1796
        %v1798 = vpop.xlane.xlu0 %1797
        %v1799 = vmul.f32 %v1798, %v1587
        %v1800 = vadd.f32 %v1799, 1e-05
        %v1801 = vrsqrt.pop %v1800
        %v1802 = vmul.f32 %v1794, %v1801
        %v1803 = vmul.f32 %v1802, %v1602
        %v1804 = vadd.f32 %v1803, %v1609
        %1805 = vst.msk [vmem:[%s570] sm:$0xff] %vm743, %v1804
        %s1806 = sand.u32 %s367, 1
        %s1807 = scalar_lea.sflag [#allocation6], %s1806
        %s1808 = sand.u32 %s367, 1
        %s1809 = smul.addr %s1808, 8
        %s1810 = scalar_lea.vmem [#allocation10], %s1809
        // Predicated region
        $region93: #{tpu_custom_call.1} parent=75 // pred_check
          %p1811 = pneg %p377
        $region94: #{tpu_custom_call.1} parent=75 // pred_check_branch
          %1813 = sbr.rel (%p1811) target = $region96
        $region95: #{tpu_custom_call.1} parent=75 // pred_region
          %s1815 = ssub.s32 128, 128
          %1816 = vsyncadd %s1807, %s1815
          %s1817 = sadd.s32 %s39, %s38
          %s1818 = smul.addr %s1817, 128
          %s1819 = scalar_lea.hbm %s14, %s1818
          %s1821 = sshll.u32 %s1810, 4
          %s1822 = int_to_ptr.vmem [resolvable:$true] %s1821
          %1824 = dma.vmem_to_hbm [thread:$0]  %s1822, 128, %s1819, %s1807
        $region96: #{tpu_custom_call.1} parent=75 // pred_fallthru
          _
      $region76: #{tpu_custom_call.1} parent=5 // pred_fallthru
        _
      %p1825 = scmp.le.s32.totalorder 2, %s29
      // Predicated region
      $region97: #{tpu_custom_call.1} parent=5 // pred_check
        %p1826 = pneg %p1825
      $region98: #{tpu_custom_call.1} parent=5 // pred_check_branch
        %1828 = sbr.rel (%p1826) target = $region100
      $region99: #{tpu_custom_call.1} parent=5 // pred_region
        %s1829 = ssub.s32 %s29, 2
        // Predicated region
        $region101: #{tpu_custom_call.1} parent=99 // pred_check
          %p1830 = pneg %p383
        $region102: #{tpu_custom_call.1} parent=99 // pred_check_branch
          %1832 = sbr.rel (%p1830) target = $region104
        $region103: #{tpu_custom_call.1} parent=99 // pred_region
          %s1833 = sand.u32 %s368, 1
          %s1834 = scalar_lea.sflag [#allocation6], %s1833
          %s1835 = sand.u32 %s368, 1
          %s1836 = smul.addr %s1835, 8
          %s1837 = scalar_lea.vmem [#allocation10], %s1836
          %1838 = dma.done %s1834, 128
        $region104: #{tpu_custom_call.1} parent=99 // pred_fallthru
          _
      $region100: #{tpu_custom_call.1} parent=5 // pred_fallthru
        _
    $region6: #{tpu_custom_call.1} parent=1 // loop_footer
      %s33 = sadd.s32 1, %s29
    $region7: #{tpu_custom_call.1} parent=1 // loop_footer_branch
      %28 = sbr.rel target = $region3
    $region8: #{tpu_custom_call.1} parent=1 // loop_exit
      _
    %1839 = vsyncpa [#allocation5], 1
    %s1840 = scalar_lea.sflag [#allocation5], 1
    %1841 = vsyncpa %s1840, 1
    %1842 = vsyncpa [#allocation8], 1
    %s1843 = scalar_lea.sflag [#allocation8], 1
    %1844 = vsyncpa %s1843, 1
    %1845 = vsyncpa [#allocation6], 1
    %s1846 = scalar_lea.sflag [#allocation6], 1
    %1847 = vsyncpa %s1846, 1

</llo_original>
